<compile_context>
chip_gen: v6e
topology: v6e:2x2x1
jax: 0.10.0
libtpu: 0.0.40
codegen_flags: <defaults>
</compile_context>

<pallas_src>
import math

import jax
import jax.numpy as jnp
import numpy as np
from jax.experimental import pallas as pl
from jax.experimental.pallas import tpu as pltpu


PARAM_ORDER = (
    "ln1_g", "ln1_b",
    "w_q", "b_q", "w_k", "b_k", "w_v", "b_v",
    "w_out", "b_out",
    "ln2_g", "ln2_b",
    "w_fc", "b_fc", "w_proj", "b_proj",
)


# ----------------------------------------------------------------------------
# Fused multi-layer kernel: one grid step = one ResidualAttentionBlock applied
# to one sequence; activation carried across the layer grid axis in VMEM.
# ----------------------------------------------------------------------------
def make_transformer_kernel(L: int, D: int, H: int, compute_dtype):
    cdt = compute_dtype

    def _layernorm(v, g_ref, b_ref):
        # fp32 LayerNorm (matches the fp16-safe LayerNorm subclass), eps=1e-5.
        mu = jnp.mean(v, axis=-1, keepdims=True)
        var = jnp.mean((v - mu) ** 2, axis=-1, keepdims=True)
        return (v - mu) * jax.lax.rsqrt(var + 1e-5) * g_ref[...] + b_ref[...]

    def kernel(x_ref,
               ln1g, ln1b, wq, bq, wk, bk, wv, bv, wo, bo,
               ln2g, ln2b, wfc, bfc, wproj, bproj,
               o_ref, act_ref):
        layer = pl.program_id(1)

        # Load the input sequence into the resident f32 accumulator on layer 0.
        @pl.when(layer == 0)
        def _():
            act_ref[...] = x_ref[...].astype(jnp.float32)

        x = act_ref[...]                                          # (L, D) f32

        # ---- ln_1 + multi-head self-attention (heads batched on leading dim) ----
        xn = _layernorm(x, ln1g, ln1b)                            # (L, D) f32
        xh = jnp.broadcast_to(xn.astype(cdt), (H, L, D))          # (H, L, D)

        # Per-head projections; scale (1/sqrt(hd)) is folded into wq/bq by the wrapper.
        qh = jnp.einsum("hld,hdk->hlk", xh, wq[...],
                        preferred_element_type=jnp.float32) + bq[...]   # (H, L, hd)
        kh = jnp.einsum("hld,hdk->hlk", xh, wk[...],
                        preferred_element_type=jnp.float32) + bk[...]
        vh = jnp.einsum("hld,hdk->hlk", xh, wv[...],
                        preferred_element_type=jnp.float32) + bv[...]

        s = jnp.einsum("hlk,hmk->hlm", qh.astype(cdt), kh.astype(cdt),
                       preferred_element_type=jnp.float32)        # (H, L, L)
        s = s - jnp.max(s, axis=-1, keepdims=True)
        p = jnp.exp(s)
        p = p * pl.reciprocal(jnp.sum(p, axis=-1, keepdims=True), approx=True)

        ah = jnp.einsum("hlm,hmk->hlk", p.astype(cdt), vh.astype(cdt),
                        preferred_element_type=jnp.float32)       # (H, L, hd)

        # Output projection: concat(heads) @ W_out == sum_h (a_h @ W_out[h]).
        proj = jnp.einsum("hlk,hkd->hld", ah.astype(cdt), wo[...],
                          preferred_element_type=jnp.float32)     # (H, L, D)
        attn = proj[0]
        for h in range(1, H):                                     # tiny unrolled VPU sum
            attn = attn + proj[h]
        attn = attn + bo[...]                                     # (L, D)

        x1 = x + attn                                             # residual 1

        # ---- ln_2 + MLP (c_fc -> QuickGELU -> c_proj) ----
        yn = _layernorm(x1, ln2g, ln2b)
        hmid = jnp.dot(yn.astype(cdt), wfc[...],
                       preferred_element_type=jnp.float32) + bfc[...]
        hmid = hmid * jax.nn.sigmoid(1.702 * hmid)                # QuickGELU
        mlp = jnp.dot(hmid.astype(cdt), wproj[...],
                      preferred_element_type=jnp.float32) + bproj[...]

        x2 = x1 + mlp                                             # residual 2
        act_ref[...] = x2                                         # carry to next layer

        @pl.when(layer == pl.num_programs(1) - 1)
        def _():
            o_ref[...] = x2.astype(o_ref.dtype)

    return kernel


# ----------------------------------------------------------------------------
# Parameter re-packing: stack per-layer params with a leading layer axis,
# split QKV into per-head (H, D, hd) tensors, fold the 1/sqrt(hd) scale into
# the Q projection, and cast matmul weights to bf16.
# ----------------------------------------------------------------------------
def pack_layers(layer_params, H, weight_dtype=jnp.bfloat16):
    D = layer_params[0]["w_qkv"].shape[0]
    hd = D // H
    scale = 1.0 / math.sqrt(hd)

    def stack(fn):
        return jnp.stack([fn(p) for p in layer_params], axis=0)

    def heads_w(w):          # (D, D) -> (H, D, hd)
        return jnp.transpose(w.reshape(D, H, hd), (1, 0, 2))

    def heads_b(b):          # (1, D) -> (H, 1, hd)
        return jnp.transpose(b.reshape(1, H, hd), (1, 0, 2))

    return {
        "ln1_g": stack(lambda p: p["ln1_g"]),
        "ln1_b": stack(lambda p: p["ln1_b"]),
        "w_q": stack(lambda p: heads_w(p["w_qkv"][:, :D]) * scale).astype(weight_dtype),
        "b_q": stack(lambda p: heads_b(p["b_qkv"][:, :D]) * scale),
        "w_k": stack(lambda p: heads_w(p["w_qkv"][:, D:2 * D])).astype(weight_dtype),
        "b_k": stack(lambda p: heads_b(p["b_qkv"][:, D:2 * D])),
        "w_v": stack(lambda p: heads_w(p["w_qkv"][:, 2 * D:])).astype(weight_dtype),
        "b_v": stack(lambda p: heads_b(p["b_qkv"][:, 2 * D:])),
        "w_out": stack(lambda p: p["w_out"].reshape(H, hd, D)).astype(weight_dtype),
        "b_out": stack(lambda p: p["b_out"]),
        "ln2_g": stack(lambda p: p["ln2_g"]),
        "ln2_b": stack(lambda p: p["ln2_b"]),
        "w_fc": stack(lambda p: p["w_fc"]).astype(weight_dtype),
        "b_fc": stack(lambda p: p["b_fc"]),
        "w_proj": stack(lambda p: p["w_proj"]).astype(weight_dtype),
        "b_proj": stack(lambda p: p["b_proj"]),
    }


# ----------------------------------------------------------------------------
# Wrapper: single pallas_call, grid = (batch, layers)
# ----------------------------------------------------------------------------
def transformer_pallas(x_lnd, layer_params, H,
                       weight_dtype=jnp.bfloat16, compute_dtype=jnp.bfloat16):
    L, N, D = x_lnd.shape
    LAYERS = len(layer_params)

    x = jnp.transpose(x_lnd, (1, 0, 2))                 # (N, L, D)
    p = pack_layers(layer_params, H, weight_dtype)

    def weight_spec(arr):
        rest = arr.shape[1:]
        nd = arr.ndim
        # weights indexed only by the layer grid axis; leading layer dim squeezed.
        return pl.BlockSpec((None,) + rest,
                            lambda n, l, _nd=nd: (l,) + (0,) * (_nd - 1))

    in_specs = [pl.BlockSpec((None, L, D), lambda n, l: (n, 0, 0))]
    in_specs += [weight_spec(p[k]) for k in PARAM_ORDER]
    # Output block index is constant across the layer axis -> resident output.
    out_spec = pl.BlockSpec((None, L, D), lambda n, l: (n, 0, 0))

    kernel = make_transformer_kernel(L, D, H, compute_dtype)

    out = pl.pallas_call(
        kernel,
        out_shape=jax.ShapeDtypeStruct((N, L, D), x_lnd.dtype),
        grid=(N, LAYERS),
        in_specs=in_specs,
        out_specs=out_spec,
        scratch_shapes=[pltpu.VMEM((L, D), jnp.float32)],   # resident activation
        compiler_params=pltpu.CompilerParams(
            dimension_semantics=("parallel", "arbitrary"),
            # Safe on all generations for these shapes; raise to 64-96 MiB on
            # v5e/v6e (128 MiB physical) for realistic CLIP widths.
            vmem_limit_bytes=32 * 1024 * 1024),
    )(x, *[p[k] for k in PARAM_ORDER])

    return jnp.transpose(out, (1, 0, 2))                # back to (L, N, D)


# ----------------------------------------------------------------------------
# Pure-JAX f32 reference (same math as the PyTorch module) for verification
# ----------------------------------------------------------------------------
def transformer_ref(x_lnd, layer_params, H):
    x = jnp.transpose(x_lnd, (1, 0, 2)).astype(jnp.float32)    # (N, L, D)
    N, L, D = x.shape
    hd = D // H
    scale = 1.0 / math.sqrt(hd)

    def ln(v, g, b):
        mu = jnp.mean(v, axis=-1, keepdims=True)
        var = jnp.mean((v - mu) ** 2, axis=-1, keepdims=True)
        return (v - mu) * jax.lax.rsqrt(var + 1e-5) * g[0] + b[0]

    for p in layer_params:
        xn = ln(x, p["ln1_g"], p["ln1_b"])
        qkv = xn @ p["w_qkv"] + p["b_qkv"][0]
        q, k, v = qkv[..., :D] * scale, qkv[..., D:2 * D], qkv[..., 2 * D:]
        q = q.reshape(N, L, H, hd).transpose(0, 2, 1, 3)
        k = k.reshape(N, L, H, hd).transpose(0, 2, 1, 3)
        v = v.reshape(N, L, H, hd).transpose(0, 2, 1, 3)
        s = jnp.einsum("nhld,nhmd->nhlm", q, k)
        pattn = jax.nn.softmax(s, axis=-1)
        a = jnp.einsum("nhlm,nhmd->nhld", pattn, v)
        a = a.transpose(0, 2, 1, 3).reshape(N, L, D)
        x = x + (a @ p["w_out"] + p["b_out"][0])
        yn = ln(x, p["ln2_g"], p["ln2_b"])
        h = yn @ p["w_fc"] + p["b_fc"][0]
        h = h * jax.nn.sigmoid(1.702 * h)
        x = x + (h @ p["w_proj"] + p["b_proj"][0])
    return jnp.transpose(x, (1, 0, 2))


# ----------------------------------------------------------------------------
# Deterministic parameter construction (weights stored pre-transposed: (in, out))
# ----------------------------------------------------------------------------
def make_params(key, layers, D):
    params = []
    for _ in range(layers):
        keys = jax.random.split(key, 13)
        key = keys[0]
        p = {
            "ln1_g": jnp.ones((1, D), jnp.float32),
            "ln1_b": 0.01 * jax.random.normal(keys[1], (1, D), jnp.float32),
            "w_qkv": 0.05 * jax.random.normal(keys[2], (D, 3 * D), jnp.float32),
            "b_qkv": 0.01 * jax.random.normal(keys[3], (1, 3 * D), jnp.float32),
            "w_out": 0.05 * jax.random.normal(keys[4], (D, D), jnp.float32),
            "b_out": 0.01 * jax.random.normal(keys[5], (1, D), jnp.float32),
            "ln2_g": jnp.ones((1, D), jnp.float32),
            "ln2_b": 0.01 * jax.random.normal(keys[6], (1, D), jnp.float32),
            "w_fc": 0.05 * jax.random.normal(keys[7], (D, 4 * D), jnp.float32),
            "b_fc": 0.01 * jax.random.normal(keys[8], (1, 4 * D), jnp.float32),
            "w_proj": 0.05 * jax.random.normal(keys[9], (4 * D, D), jnp.float32),
            "b_proj": 0.01 * jax.random.normal(keys[10], (1, D), jnp.float32),
        }
        params.append(p)
    return params


if __name__ == "__main__":
    # Small shapes: seq=8, batch=2, width=32, heads=4, layers=2, attn_mask=None
    L, N, D, H, LAYERS = 8, 2, 32, 4, 2

    key = jax.random.PRNGKey(0)
    kx, kp = jax.random.split(key)
    x = jax.random.normal(kx, (L, N, D), jnp.float32)          # (seq, batch, width)
    layer_params = make_params(kp, LAYERS, D)

    out = transformer_pallas(x, layer_params, H)
    out = jax.block_until_ready(out)

    ref = transformer_ref(x, layer_params, H)
    # bf16 matmul operands + approx softmax reciprocal vs f32 reference.
    np.testing.assert_allclose(np.asarray(out), np.asarray(ref),
                               rtol=3e-2, atol=3e-2)
    print("KERNEL_OK")
</pallas_src>

<mosaic_0001>
module attributes {stable_mosaic.version = 11 : i64} {
  func.func @kernel(%arg0: i32, %arg1: i32, %arg2: memref<1x8x32xf32, #tpu.memory_space<vmem>>, %arg3: memref<1x1x32xf32, #tpu.memory_space<vmem>>, %arg4: memref<1x1x32xf32, #tpu.memory_space<vmem>>, %arg5: memref<1x4x32x8xbf16, #tpu.memory_space<vmem>>, %arg6: memref<1x4x1x8xf32, #tpu.memory_space<vmem>>, %arg7: memref<1x4x32x8xbf16, #tpu.memory_space<vmem>>, %arg8: memref<1x4x1x8xf32, #tpu.memory_space<vmem>>, %arg9: memref<1x4x32x8xbf16, #tpu.memory_space<vmem>>, %arg10: memref<1x4x1x8xf32, #tpu.memory_space<vmem>>, %arg11: memref<1x4x8x32xbf16, #tpu.memory_space<vmem>>, %arg12: memref<1x1x32xf32, #tpu.memory_space<vmem>>, %arg13: memref<1x1x32xf32, #tpu.memory_space<vmem>>, %arg14: memref<1x1x32xf32, #tpu.memory_space<vmem>>, %arg15: memref<1x32x128xbf16, #tpu.memory_space<vmem>>, %arg16: memref<1x1x128xf32, #tpu.memory_space<vmem>>, %arg17: memref<1x128x32xbf16, #tpu.memory_space<vmem>>, %arg18: memref<1x1x32xf32, #tpu.memory_space<vmem>>, %arg19: memref<1x8x32xf32, #tpu.memory_space<vmem>>, %arg20: memref<8x32xf32, #tpu.memory_space<vmem>>) attributes {dimension_semantics = [#tpu.dimension_semantics<parallel>, #tpu.dimension_semantics<arbitrary>], iteration_bounds = array<i64: 2, 2>, scalar_prefetch = 0 : i64, scratch_operands = 1 : i64, tpu.core_type = #tpu.core_type<tc>, window_params = [{transform_indices = @transform_0, window_bounds = array<i64: 1, 8, 32>}, {transform_indices = @transform_1, window_bounds = array<i64: 1, 1, 32>}, {transform_indices = @transform_2, window_bounds = array<i64: 1, 1, 32>}, {transform_indices = @transform_3, window_bounds = array<i64: 1, 4, 32, 8>}, {transform_indices = @transform_4, window_bounds = array<i64: 1, 4, 1, 8>}, {transform_indices = @transform_5, window_bounds = array<i64: 1, 4, 32, 8>}, {transform_indices = @transform_6, window_bounds = array<i64: 1, 4, 1, 8>}, {transform_indices = @transform_7, window_bounds = array<i64: 1, 4, 32, 8>}, {transform_indices = @transform_8, window_bounds = array<i64: 1, 4, 1, 8>}, {transform_indices = @transform_9, window_bounds = array<i64: 1, 4, 8, 32>}, {transform_indices = @transform_10, window_bounds = array<i64: 1, 1, 32>}, {transform_indices = @transform_11, window_bounds = array<i64: 1, 1, 32>}, {transform_indices = @transform_12, window_bounds = array<i64: 1, 1, 32>}, {transform_indices = @transform_13, window_bounds = array<i64: 1, 32, 128>}, {transform_indices = @transform_14, window_bounds = array<i64: 1, 1, 128>}, {transform_indices = @transform_15, window_bounds = array<i64: 1, 128, 32>}, {transform_indices = @transform_16, window_bounds = array<i64: 1, 1, 32>}, {transform_indices = @transform_17, window_bounds = array<i64: 1, 8, 32>}]} {
    %c0_i32 = arith.constant 0 : i32
    %0 = arith.cmpi eq, %arg1, %c0_i32 : i32
    %1 = arith.extui %0 : i1 to i32
    %c0_i32_0 = arith.constant 0 : i32
    %2 = arith.cmpi ne, %1, %c0_i32_0 : i32
    scf.if %2 {
      %c0_81 = arith.constant 0 : index
      %c0_82 = arith.constant 0 : index
      %c0_83 = arith.constant 0 : index
      %145 = vector.load %arg2[%c0_81, %c0_82, %c0_83] : memref<1x8x32xf32, #tpu.memory_space<vmem>>, vector<1x8x32xf32>
      %146 = vector.shape_cast %145 : vector<1x8x32xf32> to vector<8x32xf32>
      %c0_84 = arith.constant 0 : index
      %c0_85 = arith.constant 0 : index
      %147 = vector.load %arg20[%c0_84, %c0_85] : memref<8x32xf32, #tpu.memory_space<vmem>>, vector<8x32xf32>
      tpu.vector_store %arg20[%c0_84, %c0_85], %146 {strides = array<i32>} : memref<8x32xf32, #tpu.memory_space<vmem>>, vector<8x32xf32>,
    } else {
    }
    %c0 = arith.constant 0 : index
    %c0_1 = arith.constant 0 : index
    %3 = vector.load %arg20[%c0, %c0_1] : memref<8x32xf32, #tpu.memory_space<vmem>>, vector<8x32xf32>
    %cst = arith.constant dense<0.000000e+00> : vector<8xf32>
    %4 = vector.multi_reduction <add>, %3, %cst [1] : vector<8x32xf32> to vector<8xf32>
    %5 = vector.shape_cast %4 : vector<8xf32> to vector<8x1xf32>
    %cst_2 = arith.constant 3.200000e+01 : f32
    %6 = vector.broadcast %cst_2 : f32 to vector<8x1xf32>
    %7 = arith.divf %5, %6 : vector<8x1xf32>
    %8 = vector.broadcast %7 : vector<8x1xf32> to vector<8x32xf32>
    %9 = arith.subf %3, %8 : vector<8x32xf32>
    %10 = arith.mulf %9, %9 : vector<8x32xf32>
    %cst_3 = arith.constant dense<0.000000e+00> : vector<8xf32>
    %11 = vector.multi_reduction <add>, %10, %cst_3 [1] : vector<8x32xf32> to vector<8xf32>
    %12 = vector.shape_cast %11 : vector<8xf32> to vector<8x1xf32>
    %cst_4 = arith.constant 3.200000e+01 : f32
    %13 = vector.broadcast %cst_4 : f32 to vector<8x1xf32>
    %14 = arith.divf %12, %13 : vector<8x1xf32>
    %15 = vector.broadcast %7 : vector<8x1xf32> to vector<8x32xf32>
    %16 = arith.subf %3, %15 : vector<8x32xf32>
    %cst_5 = arith.constant 9.99999974E-6 : f32
    %17 = vector.broadcast %cst_5 : f32 to vector<8x1xf32>
    %18 = arith.addf %14, %17 : vector<8x1xf32>
    %19 = math.rsqrt %18 : vector<8x1xf32>
    %20 = vector.broadcast %19 : vector<8x1xf32> to vector<8x32xf32>
    %21 = arith.mulf %16, %20 : vector<8x32xf32>
    %c0_6 = arith.constant 0 : index
    %c0_7 = arith.constant 0 : index
    %c0_8 = arith.constant 0 : index
    %22 = vector.load %arg3[%c0_6, %c0_7, %c0_8] : memref<1x1x32xf32, #tpu.memory_space<vmem>>, vector<1x1x32xf32>
    %23 = vector.shape_cast %22 : vector<1x1x32xf32> to vector<1x32xf32>
    %24 = vector.broadcast %23 : vector<1x32xf32> to vector<8x32xf32>
    %25 = arith.mulf %21, %24 : vector<8x32xf32>
    %c0_9 = arith.constant 0 : index
    %c0_10 = arith.constant 0 : index
    %c0_11 = arith.constant 0 : index
    %26 = vector.load %arg4[%c0_9, %c0_10, %c0_11] : memref<1x1x32xf32, #tpu.memory_space<vmem>>, vector<1x1x32xf32>
    %27 = vector.shape_cast %26 : vector<1x1x32xf32> to vector<1x32xf32>
    %28 = vector.broadcast %27 : vector<1x32xf32> to vector<8x32xf32>
    %29 = arith.addf %25, %28 : vector<8x32xf32>
    %30 = arith.truncf %29 : vector<8x32xf32> to vector<8x32xbf16>
    %31 = vector.shape_cast %30 : vector<8x32xbf16> to vector<1x8x32xbf16>
    %32 = vector.broadcast %31 : vector<1x8x32xbf16> to vector<4x8x32xbf16>
    %c0_12 = arith.constant 0 : index
    %c0_13 = arith.constant 0 : index
    %c0_14 = arith.constant 0 : index
    %c0_15 = arith.constant 0 : index
    %33 = vector.load %arg5[%c0_12, %c0_13, %c0_14, %c0_15] : memref<1x4x32x8xbf16, #tpu.memory_space<vmem>>, vector<1x4x32x8xbf16>
    %34 = vector.shape_cast %33 : vector<1x4x32x8xbf16> to vector<4x32x8xbf16>
    "tpu.trace_start"() <{level = 10 : i32, message = "hld,hdk->hlk"}> : () -> ()
    %cst_16 = arith.constant dense<0.000000e+00> : vector<4x8x8xf32>
    %35 = tpu.matmul %32, %34, %cst_16 {dimension_numbers = #tpu.dot_dimension_numbers<[2], [1], [1], [2], [0, 0, 0, 1, 1, 2], [0], [0]>} : vector<4x8x32xbf16>, vector<4x32x8xbf16>, vector<4x8x8xf32> -> vector<4x8x8xf32>
    "tpu.trace_stop"() : () -> ()
    %c0_17 = arith.constant 0 : index
    %c0_18 = arith.constant 0 : index
    %c0_19 = arith.constant 0 : index
    %c0_20 = arith.constant 0 : index
    %36 = vector.load %arg6[%c0_17, %c0_18, %c0_19, %c0_20] : memref<1x4x1x8xf32, #tpu.memory_space<vmem>>, vector<1x4x1x8xf32>
    %37 = vector.shape_cast %36 : vector<1x4x1x8xf32> to vector<4x1x8xf32>
    %38 = vector.broadcast %37 : vector<4x1x8xf32> to vector<4x8x8xf32>
    %39 = arith.addf %35, %38 : vector<4x8x8xf32>
    %c0_21 = arith.constant 0 : index
    %c0_22 = arith.constant 0 : index
    %c0_23 = arith.constant 0 : index
    %c0_24 = arith.constant 0 : index
    %40 = vector.load %arg7[%c0_21, %c0_22, %c0_23, %c0_24] : memref<1x4x32x8xbf16, #tpu.memory_space<vmem>>, vector<1x4x32x8xbf16>
    %41 = vector.shape_cast %40 : vector<1x4x32x8xbf16> to vector<4x32x8xbf16>
    "tpu.trace_start"() <{level = 10 : i32, message = "hld,hdk->hlk"}> : () -> ()
    %cst_25 = arith.constant dense<0.000000e+00> : vector<4x8x8xf32>
    %42 = tpu.matmul %32, %41, %cst_25 {dimension_numbers = #tpu.dot_dimension_numbers<[2], [1], [1], [2], [0, 0, 0, 1, 1, 2], [0], [0]>} : vector<4x8x32xbf16>, vector<4x32x8xbf16>, vector<4x8x8xf32> -> vector<4x8x8xf32>
    "tpu.trace_stop"() : () -> ()
    %c0_26 = arith.constant 0 : index
    %c0_27 = arith.constant 0 : index
    %c0_28 = arith.constant 0 : index
    %c0_29 = arith.constant 0 : index
    %43 = vector.load %arg8[%c0_26, %c0_27, %c0_28, %c0_29] : memref<1x4x1x8xf32, #tpu.memory_space<vmem>>, vector<1x4x1x8xf32>
    %44 = vector.shape_cast %43 : vector<1x4x1x8xf32> to vector<4x1x8xf32>
    %45 = vector.broadcast %44 : vector<4x1x8xf32> to vector<4x8x8xf32>
    %46 = arith.addf %42, %45 : vector<4x8x8xf32>
    %c0_30 = arith.constant 0 : index
    %c0_31 = arith.constant 0 : index
    %c0_32 = arith.constant 0 : index
    %c0_33 = arith.constant 0 : index
    %47 = vector.load %arg9[%c0_30, %c0_31, %c0_32, %c0_33] : memref<1x4x32x8xbf16, #tpu.memory_space<vmem>>, vector<1x4x32x8xbf16>
    %48 = vector.shape_cast %47 : vector<1x4x32x8xbf16> to vector<4x32x8xbf16>
    "tpu.trace_start"() <{level = 10 : i32, message = "hld,hdk->hlk"}> : () -> ()
    %cst_34 = arith.constant dense<0.000000e+00> : vector<4x8x8xf32>
    %49 = tpu.matmul %32, %48, %cst_34 {dimension_numbers = #tpu.dot_dimension_numbers<[2], [1], [1], [2], [0, 0, 0, 1, 1, 2], [0], [0]>} : vector<4x8x32xbf16>, vector<4x32x8xbf16>, vector<4x8x8xf32> -> vector<4x8x8xf32>
    "tpu.trace_stop"() : () -> ()
    %c0_35 = arith.constant 0 : index
    %c0_36 = arith.constant 0 : index
    %c0_37 = arith.constant 0 : index
    %c0_38 = arith.constant 0 : index
    %50 = vector.load %arg10[%c0_35, %c0_36, %c0_37, %c0_38] : memref<1x4x1x8xf32, #tpu.memory_space<vmem>>, vector<1x4x1x8xf32>
    %51 = vector.shape_cast %50 : vector<1x4x1x8xf32> to vector<4x1x8xf32>
    %52 = vector.broadcast %51 : vector<4x1x8xf32> to vector<4x8x8xf32>
    %53 = arith.addf %49, %52 : vector<4x8x8xf32>
    %54 = arith.truncf %39 : vector<4x8x8xf32> to vector<4x8x8xbf16>
    %55 = arith.truncf %46 : vector<4x8x8xf32> to vector<4x8x8xbf16>
    "tpu.trace_start"() <{level = 10 : i32, message = "hlk,hmk->hlm"}> : () -> ()
    %cst_39 = arith.constant dense<0.000000e+00> : vector<4x8x8xf32>
    %56 = tpu.matmul %54, %55, %cst_39 {dimension_numbers = #tpu.dot_dimension_numbers<[2], [2], [1], [1], [0, 0, 0, 1, 1, 1], [0], [0]>} : vector<4x8x8xbf16>, vector<4x8x8xbf16>, vector<4x8x8xf32> -> vector<4x8x8xf32>
    "tpu.trace_stop"() : () -> ()
    %cst_40 = arith.constant dense<0xFF800000> : vector<4x8xf32>
    %57 = vector.multi_reduction <maximumf>, %56, %cst_40 [2] : vector<4x8x8xf32> to vector<4x8xf32>
    %58 = vector.shape_cast %57 : vector<4x8xf32> to vector<4x8x1xf32>
    %59 = vector.broadcast %58 : vector<4x8x1xf32> to vector<4x8x8xf32>
    %60 = arith.subf %56, %59 : vector<4x8x8xf32>
    %61 = math.exp %60 : vector<4x8x8xf32>
    %cst_41 = arith.constant dense<0.000000e+00> : vector<4x8xf32>
    %62 = vector.multi_reduction <add>, %61, %cst_41 [2] : vector<4x8x8xf32> to vector<4x8xf32>
    %63 = vector.shape_cast %62 : vector<4x8xf32> to vector<4x8x1xf32>
    %64 = tpu.reciprocal %63 {approx = true} : vector<4x8x1xf32> -> vector<4x8x1xf32>
    %65 = vector.broadcast %64 : vector<4x8x1xf32> to vector<4x8x8xf32>
    %66 = arith.mulf %61, %65 : vector<4x8x8xf32>
    %67 = arith.truncf %66 : vector<4x8x8xf32> to vector<4x8x8xbf16>
    %68 = arith.truncf %53 : vector<4x8x8xf32> to vector<4x8x8xbf16>
    "tpu.trace_start"() <{level = 10 : i32, message = "hlm,hmk->hlk"}> : () -> ()
    %cst_42 = arith.constant dense<0.000000e+00> : vector<4x8x8xf32>
    %69 = tpu.matmul %67, %68, %cst_42 {dimension_numbers = #tpu.dot_dimension_numbers<[2], [1], [1], [2], [0, 0, 0, 1, 1, 2], [0], [0]>} : vector<4x8x8xbf16>, vector<4x8x8xbf16>, vector<4x8x8xf32> -> vector<4x8x8xf32>
    "tpu.trace_stop"() : () -> ()
    %70 = arith.truncf %69 : vector<4x8x8xf32> to vector<4x8x8xbf16>
    %c0_43 = arith.constant 0 : index
    %c0_44 = arith.constant 0 : index
    %c0_45 = arith.constant 0 : index
    %c0_46 = arith.constant 0 : index
    %71 = vector.load %arg11[%c0_43, %c0_44, %c0_45, %c0_46] : memref<1x4x8x32xbf16, #tpu.memory_space<vmem>>, vector<1x4x8x32xbf16>
    %72 = vector.shape_cast %71 : vector<1x4x8x32xbf16> to vector<4x8x32xbf16>
    "tpu.trace_start"() <{level = 10 : i32, message = "hlk,hkd->hld"}> : () -> ()
    %cst_47 = arith.constant dense<0.000000e+00> : vector<4x8x32xf32>
    %73 = tpu.matmul %70, %72, %cst_47 {dimension_numbers = #tpu.dot_dimension_numbers<[2], [1], [1], [2], [0, 0, 0, 1, 1, 2], [0], [0]>} : vector<4x8x8xbf16>, vector<4x8x32xbf16>, vector<4x8x32xf32> -> vector<4x8x32xf32>
    "tpu.trace_stop"() : () -> ()
    %74 = vector.extract_strided_slice %73 {offsets = [0, 0, 0], sizes = [1, 8, 32], strides = [1, 1, 1]} : vector<4x8x32xf32> to vector<1x8x32xf32>
    %75 = vector.shape_cast %74 : vector<1x8x32xf32> to vector<8x32xf32>
    %76 = vector.extract_strided_slice %73 {offsets = [1, 0, 0], sizes = [1, 8, 32], strides = [1, 1, 1]} : vector<4x8x32xf32> to vector<1x8x32xf32>
    %77 = vector.shape_cast %76 : vector<1x8x32xf32> to vector<8x32xf32>
    %78 = arith.addf %75, %77 : vector<8x32xf32>
    %79 = vector.extract_strided_slice %73 {offsets = [2, 0, 0], sizes = [1, 8, 32], strides = [1, 1, 1]} : vector<4x8x32xf32> to vector<1x8x32xf32>
    %80 = vector.shape_cast %79 : vector<1x8x32xf32> to vector<8x32xf32>
    %81 = arith.addf %78, %80 : vector<8x32xf32>
    %82 = vector.extract_strided_slice %73 {offsets = [3, 0, 0], sizes = [1, 8, 32], strides = [1, 1, 1]} : vector<4x8x32xf32> to vector<1x8x32xf32>
    %83 = vector.shape_cast %82 : vector<1x8x32xf32> to vector<8x32xf32>
    %84 = arith.addf %81, %83 : vector<8x32xf32>
    %c0_48 = arith.constant 0 : index
    %c0_49 = arith.constant 0 : index
    %c0_50 = arith.constant 0 : index
    %85 = vector.load %arg12[%c0_48, %c0_49, %c0_50] : memref<1x1x32xf32, #tpu.memory_space<vmem>>, vector<1x1x32xf32>
    %86 = vector.shape_cast %85 : vector<1x1x32xf32> to vector<1x32xf32>
    %87 = vector.broadcast %86 : vector<1x32xf32> to vector<8x32xf32>
    %88 = arith.addf %84, %87 : vector<8x32xf32>
    %89 = arith.addf %3, %88 : vector<8x32xf32>
    %cst_51 = arith.constant dense<0.000000e+00> : vector<8xf32>
    %90 = vector.multi_reduction <add>, %89, %cst_51 [1] : vector<8x32xf32> to vector<8xf32>
    %91 = vector.shape_cast %90 : vector<8xf32> to vector<8x1xf32>
    %cst_52 = arith.constant 3.200000e+01 : f32
    %92 = vector.broadcast %cst_52 : f32 to vector<8x1xf32>
    %93 = arith.divf %91, %92 : vector<8x1xf32>
    %94 = vector.broadcast %93 : vector<8x1xf32> to vector<8x32xf32>
    %95 = arith.subf %89, %94 : vector<8x32xf32>
    %96 = arith.mulf %95, %95 : vector<8x32xf32>
    %cst_53 = arith.constant dense<0.000000e+00> : vector<8xf32>
    %97 = vector.multi_reduction <add>, %96, %cst_53 [1] : vector<8x32xf32> to vector<8xf32>
    %98 = vector.shape_cast %97 : vector<8xf32> to vector<8x1xf32>
    %cst_54 = arith.constant 3.200000e+01 : f32
    %99 = vector.broadcast %cst_54 : f32 to vector<8x1xf32>
    %100 = arith.divf %98, %99 : vector<8x1xf32>
    %101 = vector.broadcast %93 : vector<8x1xf32> to vector<8x32xf32>
    %102 = arith.subf %89, %101 : vector<8x32xf32>
    %cst_55 = arith.constant 9.99999974E-6 : f32
    %103 = vector.broadcast %cst_55 : f32 to vector<8x1xf32>
    %104 = arith.addf %100, %103 : vector<8x1xf32>
    %105 = math.rsqrt %104 : vector<8x1xf32>
    %106 = vector.broadcast %105 : vector<8x1xf32> to vector<8x32xf32>
    %107 = arith.mulf %102, %106 : vector<8x32xf32>
    %c0_56 = arith.constant 0 : index
    %c0_57 = arith.constant 0 : index
    %c0_58 = arith.constant 0 : index
    %108 = vector.load %arg13[%c0_56, %c0_57, %c0_58] : memref<1x1x32xf32, #tpu.memory_space<vmem>>, vector<1x1x32xf32>
    %109 = vector.shape_cast %108 : vector<1x1x32xf32> to vector<1x32xf32>
    %110 = vector.broadcast %109 : vector<1x32xf32> to vector<8x32xf32>
    %111 = arith.mulf %107, %110 : vector<8x32xf32>
    %c0_59 = arith.constant 0 : index
    %c0_60 = arith.constant 0 : index
    %c0_61 = arith.constant 0 : index
    %112 = vector.load %arg14[%c0_59, %c0_60, %c0_61] : memref<1x1x32xf32, #tpu.memory_space<vmem>>, vector<1x1x32xf32>
    %113 = vector.shape_cast %112 : vector<1x1x32xf32> to vector<1x32xf32>
    %114 = vector.broadcast %113 : vector<1x32xf32> to vector<8x32xf32>
    %115 = arith.addf %111, %114 : vector<8x32xf32>
    %116 = arith.truncf %115 : vector<8x32xf32> to vector<8x32xbf16>
    %c0_62 = arith.constant 0 : index
    %c0_63 = arith.constant 0 : index
    %c0_64 = arith.constant 0 : index
    %117 = vector.load %arg15[%c0_62, %c0_63, %c0_64] : memref<1x32x128xbf16, #tpu.memory_space<vmem>>, vector<1x32x128xbf16>
    %118 = vector.shape_cast %117 : vector<1x32x128xbf16> to vector<32x128xbf16>
    %cst_65 = arith.constant dense<0.000000e+00> : vector<8x128xf32>
    %119 = tpu.matmul %116, %118, %cst_65 {dimension_numbers = #tpu.dot_dimension_numbers<[1], [0], [0], [1], [0, 0, 1, 1], [], []>} : vector<8x32xbf16>, vector<32x128xbf16>, vector<8x128xf32> -> vector<8x128xf32>
    %c0_66 = arith.constant 0 : index
    %c0_67 = arith.constant 0 : index
    %c0_68 = arith.constant 0 : index
    %120 = vector.load %arg16[%c0_66, %c0_67, %c0_68] : memref<1x1x128xf32, #tpu.memory_space<vmem>>, vector<1x1x128xf32>
    %121 = vector.shape_cast %120 : vector<1x1x128xf32> to vector<1x128xf32>
    %122 = vector.broadcast %121 : vector<1x128xf32> to vector<8x128xf32>
    %123 = arith.addf %119, %122 : vector<8x128xf32>
    %cst_69 = arith.constant 1.702000e+00 : f32
    %124 = vector.broadcast %cst_69 : f32 to vector<8x128xf32>
    %125 = arith.mulf %124, %123 : vector<8x128xf32>
    %126 = arith.negf %125 : vector<8x128xf32>
    %127 = math.exp %126 : vector<8x128xf32>
    %cst_70 = arith.constant 1.000000e+00 : f32
    %128 = vector.broadcast %cst_70 : f32 to vector<8x128xf32>
    %129 = arith.addf %128, %127 : vector<8x128xf32>
    %130 = arith.divf %128, %129 : vector<8x128xf32>
    %131 = arith.mulf %123, %130 : vector<8x128xf32>
    %132 = arith.truncf %131 : vector<8x128xf32> to vector<8x128xbf16>
    %c0_71 = arith.constant 0 : index
    %c0_72 = arith.constant 0 : index
    %c0_73 = arith.constant 0 : index
    %133 = vector.load %arg17[%c0_71, %c0_72, %c0_73] : memref<1x128x32xbf16, #tpu.memory_space<vmem>>, vector<1x128x32xbf16>
    %134 = vector.shape_cast %133 : vector<1x128x32xbf16> to vector<128x32xbf16>
    %cst_74 = arith.constant dense<0.000000e+00> : vector<8x32xf32>
    %135 = tpu.matmul %132, %134, %cst_74 {dimension_numbers = #tpu.dot_dimension_numbers<[1], [0], [0], [1], [0, 0, 1, 1], [], []>} : vector<8x128xbf16>, vector<128x32xbf16>, vector<8x32xf32> -> vector<8x32xf32>
    %c0_75 = arith.constant 0 : index
    %c0_76 = arith.constant 0 : index
    %c0_77 = arith.constant 0 : index
    %136 = vector.load %arg18[%c0_75, %c0_76, %c0_77] : memref<1x1x32xf32, #tpu.memory_space<vmem>>, vector<1x1x32xf32>
    %137 = vector.shape_cast %136 : vector<1x1x32xf32> to vector<1x32xf32>
    %138 = vector.broadcast %137 : vector<1x32xf32> to vector<8x32xf32>
    %139 = arith.addf %135, %138 : vector<8x32xf32>
    %140 = arith.addf %89, %139 : vector<8x32xf32>
    %c0_78 = arith.constant 0 : index
    %c0_79 = arith.constant 0 : index
    %141 = vector.load %arg20[%c0_78, %c0_79] : memref<8x32xf32, #tpu.memory_space<vmem>>, vector<8x32xf32>
    tpu.vector_store %arg20[%c0_78, %c0_79], %140 {strides = array<i32>} : memref<8x32xf32, #tpu.memory_space<vmem>>, vector<8x32xf32>,
    %c1_i32 = arith.constant 1 : i32
    %142 = arith.cmpi eq, %arg1, %c1_i32 : i32
    %143 = arith.extui %142 : i1 to i32
    %c0_i32_80 = arith.constant 0 : i32
    %144 = arith.cmpi ne, %143, %c0_i32_80 : i32
    scf.if %144 {
      %c0_81 = arith.constant 0 : index
      %c0_82 = arith.constant 0 : index
      %c0_83 = arith.constant 0 : index
      %145 = vector.load %arg19[%c0_81, %c0_82, %c0_83] : memref<1x8x32xf32, #tpu.memory_space<vmem>>, vector<1x8x32xf32>
      %146 = vector.shape_cast %145 : vector<1x8x32xf32> to vector<8x32xf32>
      %147 = vector.shape_cast %140 : vector<8x32xf32> to vector<1x8x32xf32>
      tpu.vector_store %arg19[%c0_81, %c0_82, %c0_83], %147 {strides = array<i32>} : memref<1x8x32xf32, #tpu.memory_space<vmem>>, vector<1x8x32xf32>,
    } else {
    }
    return
  }
  func.func @transform_0(%arg0: i32, %arg1: i32) -> (i32, i32, i32) {
    %c0_i32 = arith.constant 0 : i32
    %c0_i32_0 = arith.constant 0 : i32
    %c0_i32_1 = arith.constant 0 : i32
    return %arg0, %c0_i32, %c0_i32_0 : i32, i32, i32
  }
  func.func @transform_1(%arg0: i32, %arg1: i32) -> (i32, i32, i32) {
    %c0_i32 = arith.constant 0 : i32
    %c0_i32_0 = arith.constant 0 : i32
    %c0_i32_1 = arith.constant 0 : i32
    return %arg1, %c0_i32, %c0_i32_0 : i32, i32, i32
  }
  func.func @transform_2(%arg0: i32, %arg1: i32) -> (i32, i32, i32) {
    %c0_i32 = arith.constant 0 : i32
    %c0_i32_0 = arith.constant 0 : i32
    %c0_i32_1 = arith.constant 0 : i32
    return %arg1, %c0_i32, %c0_i32_0 : i32, i32, i32
  }
  func.func @transform_3(%arg0: i32, %arg1: i32) -> (i32, i32, i32, i32) {
    %c0_i32 = arith.constant 0 : i32
    %c0_i32_0 = arith.constant 0 : i32
    %c0_i32_1 = arith.constant 0 : i32
    %c0_i32_2 = arith.constant 0 : i32
    return %arg1, %c0_i32, %c0_i32_0, %c0_i32_1 : i32, i32, i32, i32
  }
  func.func @transform_4(%arg0: i32, %arg1: i32) -> (i32, i32, i32, i32) {
    %c0_i32 = arith.constant 0 : i32
    %c0_i32_0 = arith.constant 0 : i32
    %c0_i32_1 = arith.constant 0 : i32
    %c0_i32_2 = arith.constant 0 : i32
    return %arg1, %c0_i32, %c0_i32_0, %c0_i32_1 : i32, i32, i32, i32
  }
  func.func @transform_5(%arg0: i32, %arg1: i32) -> (i32, i32, i32, i32) {
    %c0_i32 = arith.constant 0 : i32
    %c0_i32_0 = arith.constant 0 : i32
    %c0_i32_1 = arith.constant 0 : i32
    %c0_i32_2 = arith.constant 0 : i32
    return %arg1, %c0_i32, %c0_i32_0, %c0_i32_1 : i32, i32, i32, i32
  }
  func.func @transform_6(%arg0: i32, %arg1: i32) -> (i32, i32, i32, i32) {
    %c0_i32 = arith.constant 0 : i32
    %c0_i32_0 = arith.constant 0 : i32
    %c0_i32_1 = arith.constant 0 : i32
    %c0_i32_2 = arith.constant 0 : i32
    return %arg1, %c0_i32, %c0_i32_0, %c0_i32_1 : i32, i32, i32, i32
  }
  func.func @transform_7(%arg0: i32, %arg1: i32) -> (i32, i32, i32, i32) {
    %c0_i32 = arith.constant 0 : i32
    %c0_i32_0 = arith.constant 0 : i32
    %c0_i32_1 = arith.constant 0 : i32
    %c0_i32_2 = arith.constant 0 : i32
    return %arg1, %c0_i32, %c0_i32_0, %c0_i32_1 : i32, i32, i32, i32
  }
  func.func @transform_8(%arg0: i32, %arg1: i32) -> (i32, i32, i32, i32) {
    %c0_i32 = arith.constant 0 : i32
    %c0_i32_0 = arith.constant 0 : i32
    %c0_i32_1 = arith.constant 0 : i32
    %c0_i32_2 = arith.constant 0 : i32
    return %arg1, %c0_i32, %c0_i32_0, %c0_i32_1 : i32, i32, i32, i32
  }
  func.func @transform_9(%arg0: i32, %arg1: i32) -> (i32, i32, i32, i32) {
    %c0_i32 = arith.constant 0 : i32
    %c0_i32_0 = arith.constant 0 : i32
    %c0_i32_1 = arith.constant 0 : i32
    %c0_i32_2 = arith.constant 0 : i32
    return %arg1, %c0_i32, %c0_i32_0, %c0_i32_1 : i32, i32, i32, i32
  }
  func.func @transform_10(%arg0: i32, %arg1: i32) -> (i32, i32, i32) {
    %c0_i32 = arith.constant 0 : i32
    %c0_i32_0 = arith.constant 0 : i32
    %c0_i32_1 = arith.constant 0 : i32
    return %arg1, %c0_i32, %c0_i32_0 : i32, i32, i32
  }
  func.func @transform_11(%arg0: i32, %arg1: i32) -> (i32, i32, i32) {
    %c0_i32 = arith.constant 0 : i32
    %c0_i32_0 = arith.constant 0 : i32
    %c0_i32_1 = arith.constant 0 : i32
    return %arg1, %c0_i32, %c0_i32_0 : i32, i32, i32
  }
  func.func @transform_12(%arg0: i32, %arg1: i32) -> (i32, i32, i32) {
    %c0_i32 = arith.constant 0 : i32
    %c0_i32_0 = arith.constant 0 : i32
    %c0_i32_1 = arith.constant 0 : i32
    return %arg1, %c0_i32, %c0_i32_0 : i32, i32, i32
  }
  func.func @transform_13(%arg0: i32, %arg1: i32) -> (i32, i32, i32) {
    %c0_i32 = arith.constant 0 : i32
    %c0_i32_0 = arith.constant 0 : i32
    %c0_i32_1 = arith.constant 0 : i32
    return %arg1, %c0_i32, %c0_i32_0 : i32, i32, i32
  }
  func.func @transform_14(%arg0: i32, %arg1: i32) -> (i32, i32, i32) {
    %c0_i32 = arith.constant 0 : i32
    %c0_i32_0 = arith.constant 0 : i32
    %c0_i32_1 = arith.constant 0 : i32
    return %arg1, %c0_i32, %c0_i32_0 : i32, i32, i32
  }
  func.func @transform_15(%arg0: i32, %arg1: i32) -> (i32, i32, i32) {
    %c0_i32 = arith.constant 0 : i32
    %c0_i32_0 = arith.constant 0 : i32
    %c0_i32_1 = arith.constant 0 : i32
    return %arg1, %c0_i32, %c0_i32_0 : i32, i32, i32
  }
  func.func @transform_16(%arg0: i32, %arg1: i32) -> (i32, i32, i32) {
    %c0_i32 = arith.constant 0 : i32
    %c0_i32_0 = arith.constant 0 : i32
    %c0_i32_1 = arith.constant 0 : i32
    return %arg1, %c0_i32, %c0_i32_0 : i32, i32, i32
  }
  func.func @transform_17(%arg0: i32, %arg1: i32) -> (i32, i32, i32) {
    %c0_i32 = arith.constant 0 : i32
    %c0_i32_0 = arith.constant 0 : i32
    %c0_i32_1 = arith.constant 0 : i32
    return %arg0, %c0_i32, %c0_i32_0 : i32, i32, i32
  }
}

</mosaic_0001>

<llo_original>
// kernel: tpu_custom_call.1
$region0: #{tpu_custom_call.1}
  #allocation0 [shape = 'u32[]', space=smem, size = 0x4, offset = 0x4, fixed_abs, tag = 'smem constant byte address 0x4 - core index']
  #allocation1 [shape = 'u32[144,128]{1,0:T(1,128)}', space=vmem, size = 0x12000, scoped, tag = 'internal scratch']
  #allocation2 [shape = 'f32[8,32]{1,0:T(8,128)}', space=vmem, size = 0x1000, scoped, tag = 'scratch operand']
  %s0 = inlined_call_operand.vmem [shape: f32[2,8,32], index: 0, kind: input, shape index: {}]
  %s1 = inlined_call_operand.vmem [shape: f32[2,1,32], index: 1, kind: input, shape index: {}]
  %s2 = inlined_call_operand.vmem [shape: f32[2,1,32], index: 2, kind: input, shape index: {}]
  %s3 = inlined_call_operand.vmem [shape: bf16[2,4,32,8], index: 3, kind: input, shape index: {}]
  %s4 = inlined_call_operand.vmem [shape: f32[2,4,1,8], index: 4, kind: input, shape index: {}]
  %s5 = inlined_call_operand.vmem [shape: bf16[2,4,32,8], index: 5, kind: input, shape index: {}]
  %s6 = inlined_call_operand.vmem [shape: f32[2,4,1,8], index: 6, kind: input, shape index: {}]
  %s7 = inlined_call_operand.vmem [shape: bf16[2,4,32,8], index: 7, kind: input, shape index: {}]
  %s8 = inlined_call_operand.vmem [shape: f32[2,4,1,8], index: 8, kind: input, shape index: {}]
  %s9 = inlined_call_operand.vmem [shape: bf16[2,4,8,32], index: 9, kind: input, shape index: {}]
  %s10 = inlined_call_operand.vmem [shape: f32[2,1,32], index: 10, kind: input, shape index: {}]
  %s11 = inlined_call_operand.vmem [shape: f32[2,1,32], index: 11, kind: input, shape index: {}]
  %s12 = inlined_call_operand.vmem [shape: f32[2,1,32], index: 12, kind: input, shape index: {}]
  %s13 = inlined_call_operand.vmem [shape: bf16[2,32,128], index: 13, kind: input, shape index: {}]
  %s14 = inlined_call_operand.vmem [shape: f32[2,1,128], index: 14, kind: input, shape index: {}]
  %s15 = inlined_call_operand.vmem [shape: bf16[2,128,32], index: 15, kind: input, shape index: {}]
  %s16 = inlined_call_operand.vmem [shape: f32[2,1,32], index: 16, kind: input, shape index: {}]
  %s17 = inlined_call_operand.hbm [shape: f32[2,8,32], index: 17, kind: output, shape index: {}]
  %s18 = sld [smem:[#allocation0]]
  $region109: #{tpu_custom_call.1} parent=0
    _
  %s20 = ssub.s32 1, %s18
  %s21 = scalar_select 0, %s20, %s18
  $region1: #{tpu_custom_call.1} parent=0
    #allocation3 [shape = 'u8[8192]{0}', space=vmem, size = 0x2000, scoped, tag = 'output window, operand 0']
    #allocation4 [shape = 's32[2]{0}', space=sflag, size = 0x8, scoped, tag = 'scoped memory for tpu_custom_call.1']
    %22 = vsyncpa [#allocation4], 0
    %s23 = scalar_lea.sflag [#allocation4], 1
    %24 = vsyncpa %s23, 0
    loop: start=0, step=1, limit=6
    $region2: #{tpu_custom_call.1} parent=1 // loop_pre_header
      _
    $region3: #{tpu_custom_call.1} parent=1 // loop_header
      %s26 = sphi 0, %s30
      %p27 = scmp.ge.s32.totalorder %s26, 6
      %s33 = sphi 0, %s45
      %s34 = sphi 0, %s41
      %s35 = sphi 0, %s33
      %s36 = sphi 0, %s34
      %s37 = sphi 0, %s35
      %s38 = sphi 0, %s36
      %s48 = sphi 0, %s50
      %s51 = sphi 0, %s48
      %s52 = sphi 0, %s51
      %s68 = sphi 0, %s52
      %s74 = sphi 0, %s76
      %s77 = sphi 0, %s74
      %s78 = sphi 0, %s77
      %s94 = sphi 0, %s78
      %s100 = sphi 0, %s102
      %s103 = sphi 0, %s100
      %s104 = sphi 0, %s103
      %s120 = sphi 0, %s104
      %s126 = sphi 0, %s128
      %s129 = sphi 0, %s126
      %s130 = sphi 0, %s129
      %s146 = sphi 0, %s130
      %s152 = sphi 0, %s154
      %s155 = sphi 0, %s152
      %s156 = sphi 0, %s155
      %s172 = sphi 0, %s156
      %s178 = sphi 0, %s180
      %s181 = sphi 0, %s178
      %s182 = sphi 0, %s181
      %s198 = sphi 0, %s182
      %s204 = sphi 0, %s206
      %s207 = sphi 0, %s204
      %s208 = sphi 0, %s207
      %s224 = sphi 0, %s208
      %s230 = sphi 0, %s232
      %s233 = sphi 0, %s230
      %s234 = sphi 0, %s233
      %s250 = sphi 0, %s234
      %s256 = sphi 0, %s258
      %s259 = sphi 0, %s256
      %s260 = sphi 0, %s259
      %s276 = sphi 0, %s260
      %s282 = sphi 0, %s284
      %s285 = sphi 0, %s282
      %s286 = sphi 0, %s285
      %s302 = sphi 0, %s286
      %s308 = sphi 0, %s310
      %s311 = sphi 0, %s308
      %s312 = sphi 0, %s311
      %s328 = sphi 0, %s312
      %s334 = sphi 0, %s336
      %s337 = sphi 0, %s334
      %s338 = sphi 0, %s337
      %s354 = sphi 0, %s338
      %s360 = sphi 0, %s362
      %s363 = sphi 0, %s360
      %s364 = sphi 0, %s363
      %s380 = sphi 0, %s364
      %s386 = sphi 0, %s388
      %s389 = sphi 0, %s386
      %s390 = sphi 0, %s389
      %s406 = sphi 0, %s390
      %s412 = sphi 0, %s414
      %s415 = sphi 0, %s412
      %s416 = sphi 0, %s415
      %s432 = sphi 0, %s416
      %s438 = sphi 0, %s440
      %s441 = sphi 0, %s438
      %s442 = sphi 0, %s441
      %s458 = sphi 0, %s442
      %s464 = sphi 0, %s466
      %s467 = sphi 0, %s464
      %s468 = sphi 0, %s467
      %s484 = sphi 0, %s468
      %s490 = sphi 0, %s492
      %s493 = sphi 0, %s490
      %s494 = sphi 0, %s493
      %s510 = sphi 0, %s494
    $region4: #{tpu_custom_call.1} parent=1 // loop_header_branch
      %29 = sbr.rel (%p27) target = $region8
    $region5: #{tpu_custom_call.1} parent=1 // loop_body
      %s31 = ssub.s32 %s26, 1
      %s32 = ssub.s32 %s26, 2
      %s39 = sadd.s32 1, %s34
      %p40 = scmp.ge.s32.totalorder %s39, 2
      %s41 = scalar_select %p40, 0, %s39
      %s42 = sadd.s32 1, %s33
      %s43 = scalar_select %p40, %s42, %s33
      %p44 = scmp.ge.s32.totalorder %s43, 2
      %s45 = scalar_select %p44, 0, %s43
      %s46 = ssub.s32 %s33, %s45
      %p47 = scmp.eq.s32.totalorder %s46, 0
      %s49 = sadd.s32 %s48, 1
      %s50 = scalar_select %p47, %s48, %s49
      %p53 = pneg %p47
      %p54 = scmp.eq.s32.totalorder %s26, 3
      %p55 = por %p53, %p54
      %p56 = scmp.ne.s32.totalorder %s48, %s51
      %p57 = scmp.eq.s32.totalorder %s26, 0
      %p58 = por %p56, %p57
      %p59 = scmp.ne.s32.totalorder %s48, %s51
      %p60 = scmp.eq.s32.totalorder %s31, 3
      %p61 = por %p59, %p60
      %p62 = scmp.ne.s32.totalorder %s51, %s52
      %p63 = scmp.eq.s32.totalorder %s31, 0
      %p64 = por %p62, %p63
      %p65 = scmp.ne.s32.totalorder %s51, %s52
      %p66 = scmp.eq.s32.totalorder %s32, 3
      %p67 = por %p65, %p66
      %p69 = scmp.ne.s32.totalorder %s52, %s68
      %p70 = scmp.eq.s32.totalorder %s32, 0
      %p71 = por %p69, %p70
      %s72 = ssub.s32 %s34, %s41
      %p73 = scmp.eq.s32.totalorder %s72, 0
      %s75 = sadd.s32 %s74, 1
      %s76 = scalar_select %p73, %s74, %s75
      %p79 = pneg %p73
      %p80 = scmp.eq.s32.totalorder %s26, 3
      %p81 = por %p79, %p80
      %p82 = scmp.ne.s32.totalorder %s74, %s77
      %p83 = scmp.eq.s32.totalorder %s26, 0
      %p84 = por %p82, %p83
      %p85 = scmp.ne.s32.totalorder %s74, %s77
      %p86 = scmp.eq.s32.totalorder %s31, 3
      %p87 = por %p85, %p86
      %p88 = scmp.ne.s32.totalorder %s77, %s78
      %p89 = scmp.eq.s32.totalorder %s31, 0
      %p90 = por %p88, %p89
      %p91 = scmp.ne.s32.totalorder %s77, %s78
      %p92 = scmp.eq.s32.totalorder %s32, 3
      %p93 = por %p91, %p92
      %p95 = scmp.ne.s32.totalorder %s78, %s94
      %p96 = scmp.eq.s32.totalorder %s32, 0
      %p97 = por %p95, %p96
      %s98 = ssub.s32 %s34, %s41
      %p99 = scmp.eq.s32.totalorder %s98, 0
      %s101 = sadd.s32 %s100, 1
      %s102 = scalar_select %p99, %s100, %s101
      %p105 = pneg %p99
      %p106 = scmp.eq.s32.totalorder %s26, 3
      %p107 = por %p105, %p106
      %p108 = scmp.ne.s32.totalorder %s100, %s103
      %p109 = scmp.eq.s32.totalorder %s26, 0
      %p110 = por %p108, %p109
      %p111 = scmp.ne.s32.totalorder %s100, %s103
      %p112 = scmp.eq.s32.totalorder %s31, 3
      %p113 = por %p111, %p112
      %p114 = scmp.ne.s32.totalorder %s103, %s104
      %p115 = scmp.eq.s32.totalorder %s31, 0
      %p116 = por %p114, %p115
      %p117 = scmp.ne.s32.totalorder %s103, %s104
      %p118 = scmp.eq.s32.totalorder %s32, 3
      %p119 = por %p117, %p118
      %p121 = scmp.ne.s32.totalorder %s104, %s120
      %p122 = scmp.eq.s32.totalorder %s32, 0
      %p123 = por %p121, %p122
      %s124 = ssub.s32 %s34, %s41
      %p125 = scmp.eq.s32.totalorder %s124, 0
      %s127 = sadd.s32 %s126, 1
      %s128 = scalar_select %p125, %s126, %s127
      %p131 = pneg %p125
      %p132 = scmp.eq.s32.totalorder %s26, 3
      %p133 = por %p131, %p132
      %p134 = scmp.ne.s32.totalorder %s126, %s129
      %p135 = scmp.eq.s32.totalorder %s26, 0
      %p136 = por %p134, %p135
      %p137 = scmp.ne.s32.totalorder %s126, %s129
      %p138 = scmp.eq.s32.totalorder %s31, 3
      %p139 = por %p137, %p138
      %p140 = scmp.ne.s32.totalorder %s129, %s130
      %p141 = scmp.eq.s32.totalorder %s31, 0
      %p142 = por %p140, %p141
      %p143 = scmp.ne.s32.totalorder %s129, %s130
      %p144 = scmp.eq.s32.totalorder %s32, 3
      %p145 = por %p143, %p144
      %p147 = scmp.ne.s32.totalorder %s130, %s146
      %p148 = scmp.eq.s32.totalorder %s32, 0
      %p149 = por %p147, %p148
      %s150 = ssub.s32 %s34, %s41
      %p151 = scmp.eq.s32.totalorder %s150, 0
      %s153 = sadd.s32 %s152, 1
      %s154 = scalar_select %p151, %s152, %s153
      %p157 = pneg %p151
      %p158 = scmp.eq.s32.totalorder %s26, 3
      %p159 = por %p157, %p158
      %p160 = scmp.ne.s32.totalorder %s152, %s155
      %p161 = scmp.eq.s32.totalorder %s26, 0
      %p162 = por %p160, %p161
      %p163 = scmp.ne.s32.totalorder %s152, %s155
      %p164 = scmp.eq.s32.totalorder %s31, 3
      %p165 = por %p163, %p164
      %p166 = scmp.ne.s32.totalorder %s155, %s156
      %p167 = scmp.eq.s32.totalorder %s31, 0
      %p168 = por %p166, %p167
      %p169 = scmp.ne.s32.totalorder %s155, %s156
      %p170 = scmp.eq.s32.totalorder %s32, 3
      %p171 = por %p169, %p170
      %p173 = scmp.ne.s32.totalorder %s156, %s172
      %p174 = scmp.eq.s32.totalorder %s32, 0
      %p175 = por %p173, %p174
      %s176 = ssub.s32 %s34, %s41
      %p177 = scmp.eq.s32.totalorder %s176, 0
      %s179 = sadd.s32 %s178, 1
      %s180 = scalar_select %p177, %s178, %s179
      %p183 = pneg %p177
      %p184 = scmp.eq.s32.totalorder %s26, 3
      %p185 = por %p183, %p184
      %p186 = scmp.ne.s32.totalorder %s178, %s181
      %p187 = scmp.eq.s32.totalorder %s26, 0
      %p188 = por %p186, %p187
      %p189 = scmp.ne.s32.totalorder %s178, %s181
      %p190 = scmp.eq.s32.totalorder %s31, 3
      %p191 = por %p189, %p190
      %p192 = scmp.ne.s32.totalorder %s181, %s182
      %p193 = scmp.eq.s32.totalorder %s31, 0
      %p194 = por %p192, %p193
      %p195 = scmp.ne.s32.totalorder %s181, %s182
      %p196 = scmp.eq.s32.totalorder %s32, 3
      %p197 = por %p195, %p196
      %p199 = scmp.ne.s32.totalorder %s182, %s198
      %p200 = scmp.eq.s32.totalorder %s32, 0
      %p201 = por %p199, %p200
      %s202 = ssub.s32 %s34, %s41
      %p203 = scmp.eq.s32.totalorder %s202, 0
      %s205 = sadd.s32 %s204, 1
      %s206 = scalar_select %p203, %s204, %s205
      %p209 = pneg %p203
      %p210 = scmp.eq.s32.totalorder %s26, 3
      %p211 = por %p209, %p210
      %p212 = scmp.ne.s32.totalorder %s204, %s207
      %p213 = scmp.eq.s32.totalorder %s26, 0
      %p214 = por %p212, %p213
      %p215 = scmp.ne.s32.totalorder %s204, %s207
      %p216 = scmp.eq.s32.totalorder %s31, 3
      %p217 = por %p215, %p216
      %p218 = scmp.ne.s32.totalorder %s207, %s208
      %p219 = scmp.eq.s32.totalorder %s31, 0
      %p220 = por %p218, %p219
      %p221 = scmp.ne.s32.totalorder %s207, %s208
      %p222 = scmp.eq.s32.totalorder %s32, 3
      %p223 = por %p221, %p222
      %p225 = scmp.ne.s32.totalorder %s208, %s224
      %p226 = scmp.eq.s32.totalorder %s32, 0
      %p227 = por %p225, %p226
      %s228 = ssub.s32 %s34, %s41
      %p229 = scmp.eq.s32.totalorder %s228, 0
      %s231 = sadd.s32 %s230, 1
      %s232 = scalar_select %p229, %s230, %s231
      %p235 = pneg %p229
      %p236 = scmp.eq.s32.totalorder %s26, 3
      %p237 = por %p235, %p236
      %p238 = scmp.ne.s32.totalorder %s230, %s233
      %p239 = scmp.eq.s32.totalorder %s26, 0
      %p240 = por %p238, %p239
      %p241 = scmp.ne.s32.totalorder %s230, %s233
      %p242 = scmp.eq.s32.totalorder %s31, 3
      %p243 = por %p241, %p242
      %p244 = scmp.ne.s32.totalorder %s233, %s234
      %p245 = scmp.eq.s32.totalorder %s31, 0
      %p246 = por %p244, %p245
      %p247 = scmp.ne.s32.totalorder %s233, %s234
      %p248 = scmp.eq.s32.totalorder %s32, 3
      %p249 = por %p247, %p248
      %p251 = scmp.ne.s32.totalorder %s234, %s250
      %p252 = scmp.eq.s32.totalorder %s32, 0
      %p253 = por %p251, %p252
      %s254 = ssub.s32 %s34, %s41
      %p255 = scmp.eq.s32.totalorder %s254, 0
      %s257 = sadd.s32 %s256, 1
      %s258 = scalar_select %p255, %s256, %s257
      %p261 = pneg %p255
      %p262 = scmp.eq.s32.totalorder %s26, 3
      %p263 = por %p261, %p262
      %p264 = scmp.ne.s32.totalorder %s256, %s259
      %p265 = scmp.eq.s32.totalorder %s26, 0
      %p266 = por %p264, %p265
      %p267 = scmp.ne.s32.totalorder %s256, %s259
      %p268 = scmp.eq.s32.totalorder %s31, 3
      %p269 = por %p267, %p268
      %p270 = scmp.ne.s32.totalorder %s259, %s260
      %p271 = scmp.eq.s32.totalorder %s31, 0
      %p272 = por %p270, %p271
      %p273 = scmp.ne.s32.totalorder %s259, %s260
      %p274 = scmp.eq.s32.totalorder %s32, 3
      %p275 = por %p273, %p274
      %p277 = scmp.ne.s32.totalorder %s260, %s276
      %p278 = scmp.eq.s32.totalorder %s32, 0
      %p279 = por %p277, %p278
      %s280 = ssub.s32 %s34, %s41
      %p281 = scmp.eq.s32.totalorder %s280, 0
      %s283 = sadd.s32 %s282, 1
      %s284 = scalar_select %p281, %s282, %s283
      %p287 = pneg %p281
      %p288 = scmp.eq.s32.totalorder %s26, 3
      %p289 = por %p287, %p288
      %p290 = scmp.ne.s32.totalorder %s282, %s285
      %p291 = scmp.eq.s32.totalorder %s26, 0
      %p292 = por %p290, %p291
      %p293 = scmp.ne.s32.totalorder %s282, %s285
      %p294 = scmp.eq.s32.totalorder %s31, 3
      %p295 = por %p293, %p294
      %p296 = scmp.ne.s32.totalorder %s285, %s286
      %p297 = scmp.eq.s32.totalorder %s31, 0
      %p298 = por %p296, %p297
      %p299 = scmp.ne.s32.totalorder %s285, %s286
      %p300 = scmp.eq.s32.totalorder %s32, 3
      %p301 = por %p299, %p300
      %p303 = scmp.ne.s32.totalorder %s286, %s302
      %p304 = scmp.eq.s32.totalorder %s32, 0
      %p305 = por %p303, %p304
      %s306 = ssub.s32 %s34, %s41
      %p307 = scmp.eq.s32.totalorder %s306, 0
      %s309 = sadd.s32 %s308, 1
      %s310 = scalar_select %p307, %s308, %s309
      %p313 = pneg %p307
      %p314 = scmp.eq.s32.totalorder %s26, 3
      %p315 = por %p313, %p314
      %p316 = scmp.ne.s32.totalorder %s308, %s311
      %p317 = scmp.eq.s32.totalorder %s26, 0
      %p318 = por %p316, %p317
      %p319 = scmp.ne.s32.totalorder %s308, %s311
      %p320 = scmp.eq.s32.totalorder %s31, 3
      %p321 = por %p319, %p320
      %p322 = scmp.ne.s32.totalorder %s311, %s312
      %p323 = scmp.eq.s32.totalorder %s31, 0
      %p324 = por %p322, %p323
      %p325 = scmp.ne.s32.totalorder %s311, %s312
      %p326 = scmp.eq.s32.totalorder %s32, 3
      %p327 = por %p325, %p326
      %p329 = scmp.ne.s32.totalorder %s312, %s328
      %p330 = scmp.eq.s32.totalorder %s32, 0
      %p331 = por %p329, %p330
      %s332 = ssub.s32 %s34, %s41
      %p333 = scmp.eq.s32.totalorder %s332, 0
      %s335 = sadd.s32 %s334, 1
      %s336 = scalar_select %p333, %s334, %s335
      %p339 = pneg %p333
      %p340 = scmp.eq.s32.totalorder %s26, 3
      %p341 = por %p339, %p340
      %p342 = scmp.ne.s32.totalorder %s334, %s337
      %p343 = scmp.eq.s32.totalorder %s26, 0
      %p344 = por %p342, %p343
      %p345 = scmp.ne.s32.totalorder %s334, %s337
      %p346 = scmp.eq.s32.totalorder %s31, 3
      %p347 = por %p345, %p346
      %p348 = scmp.ne.s32.totalorder %s337, %s338
      %p349 = scmp.eq.s32.totalorder %s31, 0
      %p350 = por %p348, %p349
      %p351 = scmp.ne.s32.totalorder %s337, %s338
      %p352 = scmp.eq.s32.totalorder %s32, 3
      %p353 = por %p351, %p352
      %p355 = scmp.ne.s32.totalorder %s338, %s354
      %p356 = scmp.eq.s32.totalorder %s32, 0
      %p357 = por %p355, %p356
      %s358 = ssub.s32 %s34, %s41
      %p359 = scmp.eq.s32.totalorder %s358, 0
      %s361 = sadd.s32 %s360, 1
      %s362 = scalar_select %p359, %s360, %s361
      %p365 = pneg %p359
      %p366 = scmp.eq.s32.totalorder %s26, 3
      %p367 = por %p365, %p366
      %p368 = scmp.ne.s32.totalorder %s360, %s363
      %p369 = scmp.eq.s32.totalorder %s26, 0
      %p370 = por %p368, %p369
      %p371 = scmp.ne.s32.totalorder %s360, %s363
      %p372 = scmp.eq.s32.totalorder %s31, 3
      %p373 = por %p371, %p372
      %p374 = scmp.ne.s32.totalorder %s363, %s364
      %p375 = scmp.eq.s32.totalorder %s31, 0
      %p376 = por %p374, %p375
      %p377 = scmp.ne.s32.totalorder %s363, %s364
      %p378 = scmp.eq.s32.totalorder %s32, 3
      %p379 = por %p377, %p378
      %p381 = scmp.ne.s32.totalorder %s364, %s380
      %p382 = scmp.eq.s32.totalorder %s32, 0
      %p383 = por %p381, %p382
      %s384 = ssub.s32 %s34, %s41
      %p385 = scmp.eq.s32.totalorder %s384, 0
      %s387 = sadd.s32 %s386, 1
      %s388 = scalar_select %p385, %s386, %s387
      %p391 = pneg %p385
      %p392 = scmp.eq.s32.totalorder %s26, 3
      %p393 = por %p391, %p392
      %p394 = scmp.ne.s32.totalorder %s386, %s389
      %p395 = scmp.eq.s32.totalorder %s26, 0
      %p396 = por %p394, %p395
      %p397 = scmp.ne.s32.totalorder %s386, %s389
      %p398 = scmp.eq.s32.totalorder %s31, 3
      %p399 = por %p397, %p398
      %p400 = scmp.ne.s32.totalorder %s389, %s390
      %p401 = scmp.eq.s32.totalorder %s31, 0
      %p402 = por %p400, %p401
      %p403 = scmp.ne.s32.totalorder %s389, %s390
      %p404 = scmp.eq.s32.totalorder %s32, 3
      %p405 = por %p403, %p404
      %p407 = scmp.ne.s32.totalorder %s390, %s406
      %p408 = scmp.eq.s32.totalorder %s32, 0
      %p409 = por %p407, %p408
      %s410 = ssub.s32 %s34, %s41
      %p411 = scmp.eq.s32.totalorder %s410, 0
      %s413 = sadd.s32 %s412, 1
      %s414 = scalar_select %p411, %s412, %s413
      %p417 = pneg %p411
      %p418 = scmp.eq.s32.totalorder %s26, 3
      %p419 = por %p417, %p418
      %p420 = scmp.ne.s32.totalorder %s412, %s415
      %p421 = scmp.eq.s32.totalorder %s26, 0
      %p422 = por %p420, %p421
      %p423 = scmp.ne.s32.totalorder %s412, %s415
      %p424 = scmp.eq.s32.totalorder %s31, 3
      %p425 = por %p423, %p424
      %p426 = scmp.ne.s32.totalorder %s415, %s416
      %p427 = scmp.eq.s32.totalorder %s31, 0
      %p428 = por %p426, %p427
      %p429 = scmp.ne.s32.totalorder %s415, %s416
      %p430 = scmp.eq.s32.totalorder %s32, 3
      %p431 = por %p429, %p430
      %p433 = scmp.ne.s32.totalorder %s416, %s432
      %p434 = scmp.eq.s32.totalorder %s32, 0
      %p435 = por %p433, %p434
      %s436 = ssub.s32 %s34, %s41
      %p437 = scmp.eq.s32.totalorder %s436, 0
      %s439 = sadd.s32 %s438, 1
      %s440 = scalar_select %p437, %s438, %s439
      %p443 = pneg %p437
      %p444 = scmp.eq.s32.totalorder %s26, 3
      %p445 = por %p443, %p444
      %p446 = scmp.ne.s32.totalorder %s438, %s441
      %p447 = scmp.eq.s32.totalorder %s26, 0
      %p448 = por %p446, %p447
      %p449 = scmp.ne.s32.totalorder %s438, %s441
      %p450 = scmp.eq.s32.totalorder %s31, 3
      %p451 = por %p449, %p450
      %p452 = scmp.ne.s32.totalorder %s441, %s442
      %p453 = scmp.eq.s32.totalorder %s31, 0
      %p454 = por %p452, %p453
      %p455 = scmp.ne.s32.totalorder %s441, %s442
      %p456 = scmp.eq.s32.totalorder %s32, 3
      %p457 = por %p455, %p456
      %p459 = scmp.ne.s32.totalorder %s442, %s458
      %p460 = scmp.eq.s32.totalorder %s32, 0
      %p461 = por %p459, %p460
      %s462 = ssub.s32 %s34, %s41
      %p463 = scmp.eq.s32.totalorder %s462, 0
      %s465 = sadd.s32 %s464, 1
      %s466 = scalar_select %p463, %s464, %s465
      %p469 = pneg %p463
      %p470 = scmp.eq.s32.totalorder %s26, 3
      %p471 = por %p469, %p470
      %p472 = scmp.ne.s32.totalorder %s464, %s467
      %p473 = scmp.eq.s32.totalorder %s26, 0
      %p474 = por %p472, %p473
      %p475 = scmp.ne.s32.totalorder %s464, %s467
      %p476 = scmp.eq.s32.totalorder %s31, 3
      %p477 = por %p475, %p476
      %p478 = scmp.ne.s32.totalorder %s467, %s468
      %p479 = scmp.eq.s32.totalorder %s31, 0
      %p480 = por %p478, %p479
      %p481 = scmp.ne.s32.totalorder %s467, %s468
      %p482 = scmp.eq.s32.totalorder %s32, 3
      %p483 = por %p481, %p482
      %p485 = scmp.ne.s32.totalorder %s468, %s484
      %p486 = scmp.eq.s32.totalorder %s32, 0
      %p487 = por %p485, %p486
      %s488 = ssub.s32 %s33, %s45
      %p489 = scmp.eq.s32.totalorder %s488, 0
      %s491 = sadd.s32 %s490, 1
      %s492 = scalar_select %p489, %s490, %s491
      %p495 = pneg %p489
      %p496 = scmp.eq.s32.totalorder %s26, 3
      %p497 = por %p495, %p496
      %p498 = scmp.ne.s32.totalorder %s490, %s493
      %p499 = scmp.eq.s32.totalorder %s26, 0
      %p500 = por %p498, %p499
      %p501 = scmp.ne.s32.totalorder %s490, %s493
      %p502 = scmp.eq.s32.totalorder %s31, 3
      %p503 = por %p501, %p502
      %p504 = scmp.ne.s32.totalorder %s493, %s494
      %p505 = scmp.eq.s32.totalorder %s31, 0
      %p506 = por %p504, %p505
      %p507 = scmp.ne.s32.totalorder %s493, %s494
      %p508 = scmp.eq.s32.totalorder %s32, 3
      %p509 = por %p507, %p508
      %p511 = scmp.ne.s32.totalorder %s494, %s510
      %p512 = scmp.eq.s32.totalorder %s32, 0
      %p513 = por %p511, %p512
      %p514 = scmp.le.s32.totalorder 1, %s26
      %p515 = scmp.lt.s32.totalorder %s26, 5
      %p516 = pnand %p514, %p515
      %p517 = pneg %p516
      // Predicated region
      $region9: #{tpu_custom_call.1} parent=5 // pred_check
        _
      $region10: #{tpu_custom_call.1} parent=5 // pred_check_branch
        %519 = sbr.rel (%p516) target = $region12
      $region11: #{tpu_custom_call.1} parent=5 // pred_region
        %s520 = ssub.s32 %s26, 1
      $region12: #{tpu_custom_call.1} parent=5 // pred_fallthru
        _
      %p521 = scmp.lt.s32.totalorder %s26, 4
      // Predicated region
      $region13: #{tpu_custom_call.1} parent=5 // pred_check
        %p522 = pneg %p521
      $region14: #{tpu_custom_call.1} parent=5 // pred_check_branch
        %524 = sbr.rel (%p522) target = $region16
      $region15: #{tpu_custom_call.1} parent=5 // pred_region
        // Predicated region
        $region17: #{tpu_custom_call.1} parent=15 // pred_check
          %p525 = pneg %p58
        $region18: #{tpu_custom_call.1} parent=15 // pred_check_branch
          %527 = sbr.rel (%p525) target = $region20
        $region19: #{tpu_custom_call.1} parent=15 // pred_region
          %p528 = scmp.lt.s32.totalorder %s33, 1
          %s529 = scalar_select %p528, %s33, 1
          %s530 = smul.addr %s529, 8
          %s531 = scalar_lea.vmem %s0, %s530
        $region20: #{tpu_custom_call.1} parent=15 // pred_fallthru
          _
        // Predicated region
        $region21: #{tpu_custom_call.1} parent=15 // pred_check
          %p532 = pneg %p84
        $region22: #{tpu_custom_call.1} parent=15 // pred_check_branch
          %534 = sbr.rel (%p532) target = $region24
        $region23: #{tpu_custom_call.1} parent=15 // pred_region
          %p535 = scmp.lt.s32.totalorder %s34, 1
          %s536 = scalar_select %p535, %s34, 1
          %s537 = scalar_lea.vmem %s1, %s536
        $region24: #{tpu_custom_call.1} parent=15 // pred_fallthru
          _
        // Predicated region
        $region25: #{tpu_custom_call.1} parent=15 // pred_check
          %p538 = pneg %p110
        $region26: #{tpu_custom_call.1} parent=15 // pred_check_branch
          %540 = sbr.rel (%p538) target = $region28
        $region27: #{tpu_custom_call.1} parent=15 // pred_region
          %p541 = scmp.lt.s32.totalorder %s34, 1
          %s542 = scalar_select %p541, %s34, 1
          %s543 = scalar_lea.vmem %s2, %s542
        $region28: #{tpu_custom_call.1} parent=15 // pred_fallthru
          _
        // Predicated region
        $region29: #{tpu_custom_call.1} parent=15 // pred_check
          %p544 = pneg %p136
        $region30: #{tpu_custom_call.1} parent=15 // pred_check_branch
          %546 = sbr.rel (%p544) target = $region32
        $region31: #{tpu_custom_call.1} parent=15 // pred_region
          %p547 = scmp.lt.s32.totalorder %s34, 1
          %s548 = scalar_select %p547, %s34, 1
          %s549 = smul.addr %s548, 16
          %s550 = smul.addr %s549, 4
          %s551 = scalar_lea.vmem %s3, %s550
        $region32: #{tpu_custom_call.1} parent=15 // pred_fallthru
          _
        // Predicated region
        $region33: #{tpu_custom_call.1} parent=15 // pred_check
          %p552 = pneg %p162
        $region34: #{tpu_custom_call.1} parent=15 // pred_check_branch
          %554 = sbr.rel (%p552) target = $region36
        $region35: #{tpu_custom_call.1} parent=15 // pred_region
          %p555 = scmp.lt.s32.totalorder %s34, 1
          %s556 = scalar_select %p555, %s34, 1
          %s557 = smul.addr %s556, 4
          %s558 = scalar_lea.vmem %s4, %s557
        $region36: #{tpu_custom_call.1} parent=15 // pred_fallthru
          _
        // Predicated region
        $region37: #{tpu_custom_call.1} parent=15 // pred_check
          %p559 = pneg %p188
        $region38: #{tpu_custom_call.1} parent=15 // pred_check_branch
          %561 = sbr.rel (%p559) target = $region40
        $region39: #{tpu_custom_call.1} parent=15 // pred_region
          %p562 = scmp.lt.s32.totalorder %s34, 1
          %s563 = scalar_select %p562, %s34, 1
          %s564 = smul.addr %s563, 16
          %s565 = smul.addr %s564, 4
          %s566 = scalar_lea.vmem %s5, %s565
        $region40: #{tpu_custom_call.1} parent=15 // pred_fallthru
          _
        // Predicated region
        $region41: #{tpu_custom_call.1} parent=15 // pred_check
          %p567 = pneg %p214
        $region42: #{tpu_custom_call.1} parent=15 // pred_check_branch
          %569 = sbr.rel (%p567) target = $region44
        $region43: #{tpu_custom_call.1} parent=15 // pred_region
          %p570 = scmp.lt.s32.totalorder %s34, 1
          %s571 = scalar_select %p570, %s34, 1
          %s572 = smul.addr %s571, 4
          %s573 = scalar_lea.vmem %s6, %s572
        $region44: #{tpu_custom_call.1} parent=15 // pred_fallthru
          _
        // Predicated region
        $region45: #{tpu_custom_call.1} parent=15 // pred_check
          %p574 = pneg %p240
        $region46: #{tpu_custom_call.1} parent=15 // pred_check_branch
          %576 = sbr.rel (%p574) target = $region48
        $region47: #{tpu_custom_call.1} parent=15 // pred_region
          %p577 = scmp.lt.s32.totalorder %s34, 1
          %s578 = scalar_select %p577, %s34, 1
          %s579 = smul.addr %s578, 16
          %s580 = smul.addr %s579, 4
          %s581 = scalar_lea.vmem %s7, %s580
        $region48: #{tpu_custom_call.1} parent=15 // pred_fallthru
          _
        // Predicated region
        $region49: #{tpu_custom_call.1} parent=15 // pred_check
          %p582 = pneg %p266
        $region50: #{tpu_custom_call.1} parent=15 // pred_check_branch
          %584 = sbr.rel (%p582) target = $region52
        $region51: #{tpu_custom_call.1} parent=15 // pred_region
          %p585 = scmp.lt.s32.totalorder %s34, 1
          %s586 = scalar_select %p585, %s34, 1
          %s587 = smul.addr %s586, 4
          %s588 = scalar_lea.vmem %s8, %s587
        $region52: #{tpu_custom_call.1} parent=15 // pred_fallthru
          _
        // Predicated region
        $region53: #{tpu_custom_call.1} parent=15 // pred_check
          %p589 = pneg %p292
        $region54: #{tpu_custom_call.1} parent=15 // pred_check_branch
          %591 = sbr.rel (%p589) target = $region56
        $region55: #{tpu_custom_call.1} parent=15 // pred_region
          %p592 = scmp.lt.s32.totalorder %s34, 1
          %s593 = scalar_select %p592, %s34, 1
          %s594 = smul.addr %s593, 4
          %s595 = smul.addr %s594, 4
          %s596 = scalar_lea.vmem %s9, %s595
        $region56: #{tpu_custom_call.1} parent=15 // pred_fallthru
          _
        // Predicated region
        $region57: #{tpu_custom_call.1} parent=15 // pred_check
          %p597 = pneg %p318
        $region58: #{tpu_custom_call.1} parent=15 // pred_check_branch
          %599 = sbr.rel (%p597) target = $region60
        $region59: #{tpu_custom_call.1} parent=15 // pred_region
          %p600 = scmp.lt.s32.totalorder %s34, 1
          %s601 = scalar_select %p600, %s34, 1
          %s602 = scalar_lea.vmem %s10, %s601
        $region60: #{tpu_custom_call.1} parent=15 // pred_fallthru
          _
        // Predicated region
        $region61: #{tpu_custom_call.1} parent=15 // pred_check
          %p603 = pneg %p344
        $region62: #{tpu_custom_call.1} parent=15 // pred_check_branch
          %605 = sbr.rel (%p603) target = $region64
        $region63: #{tpu_custom_call.1} parent=15 // pred_region
          %p606 = scmp.lt.s32.totalorder %s34, 1
          %s607 = scalar_select %p606, %s34, 1
          %s608 = scalar_lea.vmem %s11, %s607
        $region64: #{tpu_custom_call.1} parent=15 // pred_fallthru
          _
        // Predicated region
        $region65: #{tpu_custom_call.1} parent=15 // pred_check
          %p609 = pneg %p370
        $region66: #{tpu_custom_call.1} parent=15 // pred_check_branch
          %611 = sbr.rel (%p609) target = $region68
        $region67: #{tpu_custom_call.1} parent=15 // pred_region
          %p612 = scmp.lt.s32.totalorder %s34, 1
          %s613 = scalar_select %p612, %s34, 1
          %s614 = scalar_lea.vmem %s12, %s613
        $region68: #{tpu_custom_call.1} parent=15 // pred_fallthru
          _
        // Predicated region
        $region69: #{tpu_custom_call.1} parent=15 // pred_check
          %p615 = pneg %p396
        $region70: #{tpu_custom_call.1} parent=15 // pred_check_branch
          %617 = sbr.rel (%p615) target = $region72
        $region71: #{tpu_custom_call.1} parent=15 // pred_region
          %p618 = scmp.lt.s32.totalorder %s34, 1
          %s619 = scalar_select %p618, %s34, 1
          %s620 = smul.addr %s619, 4
          %s621 = smul.addr %s620, 4
          %s622 = scalar_lea.vmem %s13, %s621
        $region72: #{tpu_custom_call.1} parent=15 // pred_fallthru
          _
        // Predicated region
        $region73: #{tpu_custom_call.1} parent=15 // pred_check
          %p623 = pneg %p422
        $region74: #{tpu_custom_call.1} parent=15 // pred_check_branch
          %625 = sbr.rel (%p623) target = $region76
        $region75: #{tpu_custom_call.1} parent=15 // pred_region
          %p626 = scmp.lt.s32.totalorder %s34, 1
          %s627 = scalar_select %p626, %s34, 1
          %s628 = scalar_lea.vmem %s14, %s627
        $region76: #{tpu_custom_call.1} parent=15 // pred_fallthru
          _
        // Predicated region
        $region77: #{tpu_custom_call.1} parent=15 // pred_check
          %p629 = pneg %p448
        $region78: #{tpu_custom_call.1} parent=15 // pred_check_branch
          %631 = sbr.rel (%p629) target = $region80
        $region79: #{tpu_custom_call.1} parent=15 // pred_region
          %p632 = scmp.lt.s32.totalorder %s34, 1
          %s633 = scalar_select %p632, %s34, 1
          %s634 = smul.addr %s633, 16
          %s635 = smul.addr %s634, 4
          %s636 = scalar_lea.vmem %s15, %s635
        $region80: #{tpu_custom_call.1} parent=15 // pred_fallthru
          _
        // Predicated region
        $region81: #{tpu_custom_call.1} parent=15 // pred_check
          %p637 = pneg %p474
        $region82: #{tpu_custom_call.1} parent=15 // pred_check_branch
          %639 = sbr.rel (%p637) target = $region84
        $region83: #{tpu_custom_call.1} parent=15 // pred_region
          %p640 = scmp.lt.s32.totalorder %s34, 1
          %s641 = scalar_select %p640, %s34, 1
          %s642 = scalar_lea.vmem %s16, %s641
        $region84: #{tpu_custom_call.1} parent=15 // pred_fallthru
          _
      $region16: #{tpu_custom_call.1} parent=5 // pred_fallthru
        _
      %p643 = scmp.le.s32.totalorder 1, %s26
      %p644 = scmp.lt.s32.totalorder %s26, 5
      %p645 = pnand %p643, %p644
      %p646 = pneg %p645
      // Predicated region
      $region85: #{tpu_custom_call.1} parent=5 // pred_check
        _
      $region86: #{tpu_custom_call.1} parent=5 // pred_check_branch
        %648 = sbr.rel (%p645) target = $region88
      $region87: #{tpu_custom_call.1} parent=5 // pred_region
        %s649 = ssub.s32 %s26, 1
        %p650 = scmp.lt.s32.totalorder %s35, 1
        %s651 = scalar_select %p650, %s35, 1
        %s652 = smul.addr %s651, 8
        %s653 = scalar_lea.vmem %s0, %s652
        %p654 = pneg %p64
        %p655 = pneg %p61
        %p656 = scmp.lt.s32.totalorder %s36, 1
        %s657 = scalar_select %p656, %s36, 1
        %s658 = scalar_lea.vmem %s1, %s657
        %p659 = pneg %p90
        %p660 = pneg %p87
        %p661 = scmp.lt.s32.totalorder %s36, 1
        %s662 = scalar_select %p661, %s36, 1
        %s663 = scalar_lea.vmem %s2, %s662
        %p664 = pneg %p116
        %p665 = pneg %p113
        %p666 = scmp.lt.s32.totalorder %s36, 1
        %s667 = scalar_select %p666, %s36, 1
        %s668 = smul.addr %s667, 16
        %s669 = smul.addr %s668, 4
        %s670 = scalar_lea.vmem %s3, %s669
        %p671 = pneg %p142
        %p672 = pneg %p139
        %p673 = scmp.lt.s32.totalorder %s36, 1
        %s674 = scalar_select %p673, %s36, 1
        %s675 = smul.addr %s674, 4
        %s676 = scalar_lea.vmem %s4, %s675
        %p677 = pneg %p168
        %p678 = pneg %p165
        %p679 = scmp.lt.s32.totalorder %s36, 1
        %s680 = scalar_select %p679, %s36, 1
        %s681 = smul.addr %s680, 16
        %s682 = smul.addr %s681, 4
        %s683 = scalar_lea.vmem %s5, %s682
        %p684 = pneg %p194
        %p685 = pneg %p191
        %p686 = scmp.lt.s32.totalorder %s36, 1
        %s687 = scalar_select %p686, %s36, 1
        %s688 = smul.addr %s687, 4
        %s689 = scalar_lea.vmem %s6, %s688
        %p690 = pneg %p220
        %p691 = pneg %p217
        %p692 = scmp.lt.s32.totalorder %s36, 1
        %s693 = scalar_select %p692, %s36, 1
        %s694 = smul.addr %s693, 16
        %s695 = smul.addr %s694, 4
        %s696 = scalar_lea.vmem %s7, %s695
        %p697 = pneg %p246
        %p698 = pneg %p243
        %p699 = scmp.lt.s32.totalorder %s36, 1
        %s700 = scalar_select %p699, %s36, 1
        %s701 = smul.addr %s700, 4
        %s702 = scalar_lea.vmem %s8, %s701
        %p703 = pneg %p272
        %p704 = pneg %p269
        %p705 = scmp.lt.s32.totalorder %s36, 1
        %s706 = scalar_select %p705, %s36, 1
        %s707 = smul.addr %s706, 4
        %s708 = smul.addr %s707, 4
        %s709 = scalar_lea.vmem %s9, %s708
        %p710 = pneg %p298
        %p711 = pneg %p295
        %p712 = scmp.lt.s32.totalorder %s36, 1
        %s713 = scalar_select %p712, %s36, 1
        %s714 = scalar_lea.vmem %s10, %s713
        %p715 = pneg %p324
        %p716 = pneg %p321
        %p717 = scmp.lt.s32.totalorder %s36, 1
        %s718 = scalar_select %p717, %s36, 1
        %s719 = scalar_lea.vmem %s11, %s718
        %p720 = pneg %p350
        %p721 = pneg %p347
        %p722 = scmp.lt.s32.totalorder %s36, 1
        %s723 = scalar_select %p722, %s36, 1
        %s724 = scalar_lea.vmem %s12, %s723
        %p725 = pneg %p376
        %p726 = pneg %p373
        %p727 = scmp.lt.s32.totalorder %s36, 1
        %s728 = scalar_select %p727, %s36, 1
        %s729 = smul.addr %s728, 4
        %s730 = smul.addr %s729, 4
        %s731 = scalar_lea.vmem %s13, %s730
        %p732 = pneg %p402
        %p733 = pneg %p399
        %p734 = scmp.lt.s32.totalorder %s36, 1
        %s735 = scalar_select %p734, %s36, 1
        %s736 = scalar_lea.vmem %s14, %s735
        %p737 = pneg %p428
        %p738 = pneg %p425
        %p739 = scmp.lt.s32.totalorder %s36, 1
        %s740 = scalar_select %p739, %s36, 1
        %s741 = smul.addr %s740, 16
        %s742 = smul.addr %s741, 4
        %s743 = scalar_lea.vmem %s15, %s742
        %p744 = pneg %p454
        %p745 = pneg %p451
        %p746 = scmp.lt.s32.totalorder %s36, 1
        %s747 = scalar_select %p746, %s36, 1
        %s748 = scalar_lea.vmem %s16, %s747
        %p749 = pneg %p480
        %p750 = pneg %p477
        %p751 = pneg %p506
        %p752 = pneg %p503
        %s753 = sand.u32 %s493, 1
        %s754 = scalar_lea.sflag [#allocation4], %s753
        %s755 = sand.u32 %s493, 1
        %s756 = smul.addr %s755, 8
        %s757 = scalar_lea.vmem [#allocation3], %s756
        %p758 = scmp.lt.s32.totalorder %s35, 1
        %s759 = scalar_select %p758, %s35, 1
        %s760 = smul.addr %s759, 8
        %s761 = scalar_lea.vmem %s0, %s760
        %p762 = scmp.lt.s32.totalorder %s36, 1
        %s763 = scalar_select %p762, %s36, 1
        %s764 = scalar_lea.vmem %s1, %s763
        %p765 = scmp.lt.s32.totalorder %s36, 1
        %s766 = scalar_select %p765, %s36, 1
        %s767 = scalar_lea.vmem %s2, %s766
        %p768 = scmp.lt.s32.totalorder %s36, 1
        %s769 = scalar_select %p768, %s36, 1
        %s770 = smul.addr %s769, 16
        %s771 = smul.addr %s770, 4
        %s772 = scalar_lea.vmem %s3, %s771
        %p773 = scmp.lt.s32.totalorder %s36, 1
        %s774 = scalar_select %p773, %s36, 1
        %s775 = smul.addr %s774, 4
        %s776 = scalar_lea.vmem %s4, %s775
        %p777 = scmp.lt.s32.totalorder %s36, 1
        %s778 = scalar_select %p777, %s36, 1
        %s779 = smul.addr %s778, 16
        %s780 = smul.addr %s779, 4
        %s781 = scalar_lea.vmem %s5, %s780
        %p782 = scmp.lt.s32.totalorder %s36, 1
        %s783 = scalar_select %p782, %s36, 1
        %s784 = smul.addr %s783, 4
        %s785 = scalar_lea.vmem %s6, %s784
        %p786 = scmp.lt.s32.totalorder %s36, 1
        %s787 = scalar_select %p786, %s36, 1
        %s788 = smul.addr %s787, 16
        %s789 = smul.addr %s788, 4
        %s790 = scalar_lea.vmem %s7, %s789
        %p791 = scmp.lt.s32.totalorder %s36, 1
        %s792 = scalar_select %p791, %s36, 1
        %s793 = smul.addr %s792, 4
        %s794 = scalar_lea.vmem %s8, %s793
        %p795 = scmp.lt.s32.totalorder %s36, 1
        %s796 = scalar_select %p795, %s36, 1
        %s797 = smul.addr %s796, 4
        %s798 = smul.addr %s797, 4
        %s799 = scalar_lea.vmem %s9, %s798
        %p800 = scmp.lt.s32.totalorder %s36, 1
        %s801 = scalar_select %p800, %s36, 1
        %s802 = scalar_lea.vmem %s10, %s801
        %p803 = scmp.lt.s32.totalorder %s36, 1
        %s804 = scalar_select %p803, %s36, 1
        %s805 = scalar_lea.vmem %s11, %s804
        %p806 = scmp.lt.s32.totalorder %s36, 1
        %s807 = scalar_select %p806, %s36, 1
        %s808 = scalar_lea.vmem %s12, %s807
        %p809 = scmp.lt.s32.totalorder %s36, 1
        %s810 = scalar_select %p809, %s36, 1
        %s811 = smul.addr %s810, 4
        %s812 = smul.addr %s811, 4
        %s813 = scalar_lea.vmem %s13, %s812
        %p814 = scmp.lt.s32.totalorder %s36, 1
        %s815 = scalar_select %p814, %s36, 1
        %s816 = scalar_lea.vmem %s14, %s815
        %p817 = scmp.lt.s32.totalorder %s36, 1
        %s818 = scalar_select %p817, %s36, 1
        %s819 = smul.addr %s818, 16
        %s820 = smul.addr %s819, 4
        %s821 = scalar_lea.vmem %s15, %s820
        %p822 = scmp.lt.s32.totalorder %s36, 1
        %s823 = scalar_select %p822, %s36, 1
        %s824 = scalar_lea.vmem %s16, %s823
        %p826 = scmp.eq.s32.totalorder %s36, 0
        // Predicated region
        $region89: #{tpu_custom_call.1} parent=87 // pred_check
          %p827 = pneg %p826
        $region90: #{tpu_custom_call.1} parent=87 // pred_check_branch
          %829 = sbr.rel (%p827) target = $region92
        $region91: #{tpu_custom_call.1} parent=87 // pred_region
          %v830 = vld [vmem:[%s761] sm:$0xff]
          %vm831 = vcmask 261120
          %832 = vst.msk [vmem:[#allocation2] sm:$0xff] %vm831, %v830
        $region92: #{tpu_custom_call.1} parent=87 // pred_fallthru
          _
        %v833 = vld [vmem:[#allocation2] sm:$0xff]
        %vm834 = vcmask 261120
        %v835 = vsel %vm834, %v833, 0.0
        %836 = vadd.xlane.f32.xlu0 %v835
        %v837 = vpop.xlane.xlu0 %836
        %v838 = vrcp.pop 32.0
        %v839 = vmul.f32 %v837, %v838
        %v840 = vsub.f32 %v833, %v839
        %v841 = vmul.f32 %v840, %v840
        %v842 = vsel %vm834, %v841, 0.0
        %843 = vadd.xlane.f32.xlu0 %v842
        %v844 = vpop.xlane.xlu0 %843
        %v845 = vmul.f32 %v844, %v838
        %v846 = vadd.f32 %v845, 1e-05
        %v847 = vrsqrt.pop %v846
        %v848 = vmul.f32 %v840, %v847
        %v849 = vld [vmem:[%s764] sm:$0x1]
        %v851 = vlaneseq
        %v852 = vshrl.u32 %v851, 7
        %v853 = vsub.s32 0, %v852
        %v854 = vrot.slane %v849, %v853
        %v856 = vmul.f32 %v848, %v854
        %v857 = vld [vmem:[%s767] sm:$0x1]
        %v859 = vlaneseq
        %v860 = vshrl.u32 %v859, 7
        %v861 = vsub.s32 0, %v860
        %v862 = vrot.slane %v857, %v861
        %v864 = vadd.f32 %v856, %v862
        %v865 = vpack.c.bf16 %v864, %v864
        %v866 = vld [vmem:[%s772] sm:$0xf]
        %v867 = vld [vmem:[%s772 + $0x4] sm:$0xf]
        %v868 = vld [vmem:[%s772 + $0x8] sm:$0xf]
        %v869 = vld [vmem:[%s772 + $0xc] sm:$0xf]
        %v870 = vld [vmem:[%s772 + $0x10] sm:$0xf]
        %v871 = vld [vmem:[%s772 + $0x14] sm:$0xf]
        %v872 = vld [vmem:[%s772 + $0x18] sm:$0xf]
        %v873 = vld [vmem:[%s772 + $0x1c] sm:$0xf]
        %v874 = vld [vmem:[%s772 + $0x20] sm:$0xf]
        %v875 = vld [vmem:[%s772 + $0x24] sm:$0xf]
        %v876 = vld [vmem:[%s772 + $0x28] sm:$0xf]
        %v877 = vld [vmem:[%s772 + $0x2c] sm:$0xf]
        %v878 = vld [vmem:[%s772 + $0x30] sm:$0xf]
        %v879 = vld [vmem:[%s772 + $0x34] sm:$0xf]
        %v880 = vld [vmem:[%s772 + $0x38] sm:$0xf]
        %v881 = vld [vmem:[%s772 + $0x3c] sm:$0xf]
        %v882 = vld [vmem:[%s776] sm:$0x1]
        %v883 = vld [vmem:[%s776 + $0x1] sm:$0x1]
        %v884 = vld [vmem:[%s776 + $0x2] sm:$0x1]
        %v885 = vld [vmem:[%s776 + $0x3] sm:$0x1]
        %v890 = vlaneseq
        %v891 = vshrl.u32 %v890, 7
        %v892 = vsub.s32 0, %v891
        %v893 = vrot.slane %v882, %v892
        %v894 = vlaneseq
        %v895 = vshrl.u32 %v894, 7
        %v896 = vsub.s32 0, %v895
        %v897 = vrot.slane %v883, %v896
        %v898 = vlaneseq
        %v899 = vshrl.u32 %v898, 7
        %v900 = vsub.s32 0, %v899
        %v901 = vrot.slane %v884, %v900
        %v902 = vlaneseq
        %v903 = vshrl.u32 %v902, 7
        %v904 = vsub.s32 0, %v903
        %v905 = vrot.slane %v885, %v904
        %v914 = vunpack.c.l.b16 %v866
        %v915 = vunpack.c.l.b16 %v867
        %v916 = vunpack.c.l.b16 %v868
        %v917 = vunpack.c.l.b16 %v869
        %v918 = vpack.c.b16 %v915, %v914
        %v919 = vpack.c.b16 %v917, %v916
        %v923 = vsel %vm834, %v865, 0
        %925 = vmatprep.subr.bf16.mxu0 0
        %926 = vmatpush1.bf16.msra.mxu0 0
        %927 = vmatprep.subr.bf16.mxu0 0
        %928 = vmatpush1.bf16.msra.mxu0 0
        %929 = vmatprep.subr.bf16.mxu0 0
        %930 = vmatpush1.bf16.msra.mxu0 0
        %931 = vmatprep.subr.bf16.mxu0 0
        %932 = vmatpush1.bf16.msra.mxu0 0
        %933 = vmatprep.subr.bf16.mxu0 0
        %934 = vmatpush1.bf16.msra.mxu0 0
        %935 = vmatprep.subr.bf16.mxu0 0
        %936 = vmatpush1.bf16.msra.mxu0 0
        %937 = vmatprep.subr.bf16.mxu0 0
        %938 = vmatpush1.bf16.msra.mxu0 %v919
        %939 = vmatprep.subr.bf16.mxu0 0
        %940 = vmatpush1.bf16.msra.mxu0 %v918
        %941 = vmatprep.subr.bf16.mxu0 0
        %942 = vmatpush2.bf16.msra.mxu0 0
        %943 = vmatprep.subr.bf16.mxu0 0
        %944 = vmatpush2.bf16.msra.mxu0 0
        %945 = vmatprep.subr.bf16.mxu0 0
        %946 = vmatpush2.bf16.msra.mxu0 0
        %947 = vmatprep.subr.bf16.mxu0 0
        %948 = vmatpush2.bf16.msra.mxu0 0
        %949 = vmatprep.subr.bf16.mxu0 0
        %950 = vmatpush2.bf16.msra.mxu0 0
        %951 = vmatprep.subr.bf16.mxu0 0
        %952 = vmatpush2.bf16.msra.mxu0 0
        %953 = vmatprep.subr.bf16.mxu0 0
        %954 = vmatpush2.bf16.msra.mxu0 0
        %955 = vmatprep.subr.bf16.mxu0 0
        %956 = vmatpush2.bf16.msra.mxu0 0
        %957 = vmatprep.mubr.bf16.mxu0 0
        %958 = vmatmul.mubr.bf16.gmra.mxu0 %v923
        %v959 = vpop.f32.mrf.mxu0
        %v960 = vadd.f32 %v893, %v959
        %v961 = vpop.f32.mrf.mxu0
        %v962 = vpop.f32.mrf.mxu0
        %v963 = vpop.f32.mrf.mxu0
        %964 = vdwg.mxu0
        %v969 = vunpack.c.l.b16 %v870
        %v970 = vunpack.c.l.b16 %v871
        %v971 = vunpack.c.l.b16 %v872
        %v972 = vunpack.c.l.b16 %v873
        %v973 = vpack.c.b16 %v970, %v969
        %v974 = vpack.c.b16 %v972, %v971
        %977 = vmatprep.subr.bf16.mxu0 0
        %978 = vmatpush1.bf16.msra.mxu0 0
        %979 = vmatprep.subr.bf16.mxu0 0
        %980 = vmatpush1.bf16.msra.mxu0 0
        %981 = vmatprep.subr.bf16.mxu0 0
        %982 = vmatpush1.bf16.msra.mxu0 0
        %983 = vmatprep.subr.bf16.mxu0 0
        %984 = vmatpush1.bf16.msra.mxu0 0
        %985 = vmatprep.subr.bf16.mxu0 0
        %986 = vmatpush1.bf16.msra.mxu0 0
        %987 = vmatprep.subr.bf16.mxu0 0
        %988 = vmatpush1.bf16.msra.mxu0 0
        %989 = vmatprep.subr.bf16.mxu0 0
        %990 = vmatpush1.bf16.msra.mxu0 %v974
        %991 = vmatprep.subr.bf16.mxu0 0
        %992 = vmatpush1.bf16.msra.mxu0 %v973
        %993 = vmatprep.subr.bf16.mxu0 0
        %994 = vmatpush2.bf16.msra.mxu0 0
        %995 = vmatprep.subr.bf16.mxu0 0
        %996 = vmatpush2.bf16.msra.mxu0 0
        %997 = vmatprep.subr.bf16.mxu0 0
        %998 = vmatpush2.bf16.msra.mxu0 0
        %999 = vmatprep.subr.bf16.mxu0 0
        %1000 = vmatpush2.bf16.msra.mxu0 0
        %1001 = vmatprep.subr.bf16.mxu0 0
        %1002 = vmatpush2.bf16.msra.mxu0 0
        %1003 = vmatprep.subr.bf16.mxu0 0
        %1004 = vmatpush2.bf16.msra.mxu0 0
        %1005 = vmatprep.subr.bf16.mxu0 0
        %1006 = vmatpush2.bf16.msra.mxu0 0
        %1007 = vmatprep.subr.bf16.mxu0 0
        %1008 = vmatpush2.bf16.msra.mxu0 0
        %1009 = vmatprep.mubr.bf16.mxu0 0
        %1010 = vmatmul.mubr.bf16.gmra.mxu0 %v923
        %v1011 = vpop.f32.mrf.mxu0
        %v1012 = vadd.f32 %v897, %v1011
        %v1013 = vpop.f32.mrf.mxu0
        %v1014 = vpop.f32.mrf.mxu0
        %v1015 = vpop.f32.mrf.mxu0
        %1016 = vdwg.mxu0
        %v1021 = vunpack.c.l.b16 %v874
        %v1022 = vunpack.c.l.b16 %v875
        %v1023 = vunpack.c.l.b16 %v876
        %v1024 = vunpack.c.l.b16 %v877
        %v1025 = vpack.c.b16 %v1022, %v1021
        %v1026 = vpack.c.b16 %v1024, %v1023
        %1029 = vmatprep.subr.bf16.mxu0 0
        %1030 = vmatpush1.bf16.msra.mxu0 0
        %1031 = vmatprep.subr.bf16.mxu0 0
        %1032 = vmatpush1.bf16.msra.mxu0 0
        %1033 = vmatprep.subr.bf16.mxu0 0
        %1034 = vmatpush1.bf16.msra.mxu0 0
        %1035 = vmatprep.subr.bf16.mxu0 0
        %1036 = vmatpush1.bf16.msra.mxu0 0
        %1037 = vmatprep.subr.bf16.mxu0 0
        %1038 = vmatpush1.bf16.msra.mxu0 0
        %1039 = vmatprep.subr.bf16.mxu0 0
        %1040 = vmatpush1.bf16.msra.mxu0 0
        %1041 = vmatprep.subr.bf16.mxu0 0
        %1042 = vmatpush1.bf16.msra.mxu0 %v1026
        %1043 = vmatprep.subr.bf16.mxu0 0
        %1044 = vmatpush1.bf16.msra.mxu0 %v1025
        %1045 = vmatprep.subr.bf16.mxu0 0
        %1046 = vmatpush2.bf16.msra.mxu0 0
        %1047 = vmatprep.subr.bf16.mxu0 0
        %1048 = vmatpush2.bf16.msra.mxu0 0
        %1049 = vmatprep.subr.bf16.mxu0 0
        %1050 = vmatpush2.bf16.msra.mxu0 0
        %1051 = vmatprep.subr.bf16.mxu0 0
        %1052 = vmatpush2.bf16.msra.mxu0 0
        %1053 = vmatprep.subr.bf16.mxu0 0
        %1054 = vmatpush2.bf16.msra.mxu0 0
        %1055 = vmatprep.subr.bf16.mxu0 0
        %1056 = vmatpush2.bf16.msra.mxu0 0
        %1057 = vmatprep.subr.bf16.mxu0 0
        %1058 = vmatpush2.bf16.msra.mxu0 0
        %1059 = vmatprep.subr.bf16.mxu0 0
        %1060 = vmatpush2.bf16.msra.mxu0 0
        %1061 = vmatprep.mubr.bf16.mxu0 0
        %1062 = vmatmul.mubr.bf16.gmra.mxu0 %v923
        %v1063 = vpop.f32.mrf.mxu0
        %v1064 = vadd.f32 %v901, %v1063
        %v1065 = vpop.f32.mrf.mxu0
        %v1066 = vpop.f32.mrf.mxu0
        %v1067 = vpop.f32.mrf.mxu0
        %1068 = vdwg.mxu0
        %v1073 = vunpack.c.l.b16 %v878
        %v1074 = vunpack.c.l.b16 %v879
        %v1075 = vunpack.c.l.b16 %v880
        %v1076 = vunpack.c.l.b16 %v881
        %v1077 = vpack.c.b16 %v1074, %v1073
        %v1078 = vpack.c.b16 %v1076, %v1075
        %1081 = vmatprep.subr.bf16.mxu0 0
        %1082 = vmatpush1.bf16.msra.mxu0 0
        %1083 = vmatprep.subr.bf16.mxu0 0
        %1084 = vmatpush1.bf16.msra.mxu0 0
        %1085 = vmatprep.subr.bf16.mxu0 0
        %1086 = vmatpush1.bf16.msra.mxu0 0
        %1087 = vmatprep.subr.bf16.mxu0 0
        %1088 = vmatpush1.bf16.msra.mxu0 0
        %1089 = vmatprep.subr.bf16.mxu0 0
        %1090 = vmatpush1.bf16.msra.mxu0 0
        %1091 = vmatprep.subr.bf16.mxu0 0
        %1092 = vmatpush1.bf16.msra.mxu0 0
        %1093 = vmatprep.subr.bf16.mxu0 0
        %1094 = vmatpush1.bf16.msra.mxu0 %v1078
        %1095 = vmatprep.subr.bf16.mxu0 0
        %1096 = vmatpush1.bf16.msra.mxu0 %v1077
        %1097 = vmatprep.subr.bf16.mxu0 0
        %1098 = vmatpush2.bf16.msra.mxu0 0
        %1099 = vmatprep.subr.bf16.mxu0 0
        %1100 = vmatpush2.bf16.msra.mxu0 0
        %1101 = vmatprep.subr.bf16.mxu0 0
        %1102 = vmatpush2.bf16.msra.mxu0 0
        %1103 = vmatprep.subr.bf16.mxu0 0
        %1104 = vmatpush2.bf16.msra.mxu0 0
        %1105 = vmatprep.subr.bf16.mxu0 0
        %1106 = vmatpush2.bf16.msra.mxu0 0
        %1107 = vmatprep.subr.bf16.mxu0 0
        %1108 = vmatpush2.bf16.msra.mxu0 0
        %1109 = vmatprep.subr.bf16.mxu0 0
        %1110 = vmatpush2.bf16.msra.mxu0 0
        %1111 = vmatprep.subr.bf16.mxu0 0
        %1112 = vmatpush2.bf16.msra.mxu0 0
        %1113 = vmatprep.mubr.bf16.mxu0 0
        %1114 = vmatmul.mubr.bf16.gmra.mxu0 %v923
        %v1115 = vpop.f32.mrf.mxu0
        %v1116 = vadd.f32 %v905, %v1115
        %v1117 = vpop.f32.mrf.mxu0
        %v1118 = vpop.f32.mrf.mxu0
        %v1119 = vpop.f32.mrf.mxu0
        %1120 = vdwg.mxu0
        %v1121 = vld [vmem:[%s781] sm:$0xf]
        %v1122 = vld [vmem:[%s781 + $0x4] sm:$0xf]
        %v1123 = vld [vmem:[%s781 + $0x8] sm:$0xf]
        %v1124 = vld [vmem:[%s781 + $0xc] sm:$0xf]
        %v1125 = vld [vmem:[%s781 + $0x10] sm:$0xf]
        %v1126 = vld [vmem:[%s781 + $0x14] sm:$0xf]
        %v1127 = vld [vmem:[%s781 + $0x18] sm:$0xf]
        %v1128 = vld [vmem:[%s781 + $0x1c] sm:$0xf]
        %v1129 = vld [vmem:[%s781 + $0x20] sm:$0xf]
        %v1130 = vld [vmem:[%s781 + $0x24] sm:$0xf]
        %v1131 = vld [vmem:[%s781 + $0x28] sm:$0xf]
        %v1132 = vld [vmem:[%s781 + $0x2c] sm:$0xf]
        %v1133 = vld [vmem:[%s781 + $0x30] sm:$0xf]
        %v1134 = vld [vmem:[%s781 + $0x34] sm:$0xf]
        %v1135 = vld [vmem:[%s781 + $0x38] sm:$0xf]
        %v1136 = vld [vmem:[%s781 + $0x3c] sm:$0xf]
        %v1137 = vld [vmem:[%s785] sm:$0x1]
        %v1138 = vld [vmem:[%s785 + $0x1] sm:$0x1]
        %v1139 = vld [vmem:[%s785 + $0x2] sm:$0x1]
        %v1140 = vld [vmem:[%s785 + $0x3] sm:$0x1]
        %v1145 = vlaneseq
        %v1146 = vshrl.u32 %v1145, 7
        %v1147 = vsub.s32 0, %v1146
        %v1148 = vrot.slane %v1137, %v1147
        %v1149 = vlaneseq
        %v1150 = vshrl.u32 %v1149, 7
        %v1151 = vsub.s32 0, %v1150
        %v1152 = vrot.slane %v1138, %v1151
        %v1153 = vlaneseq
        %v1154 = vshrl.u32 %v1153, 7
        %v1155 = vsub.s32 0, %v1154
        %v1156 = vrot.slane %v1139, %v1155
        %v1157 = vlaneseq
        %v1158 = vshrl.u32 %v1157, 7
        %v1159 = vsub.s32 0, %v1158
        %v1160 = vrot.slane %v1140, %v1159
        %v1169 = vunpack.c.l.b16 %v1121
        %v1170 = vunpack.c.l.b16 %v1122
        %v1171 = vunpack.c.l.b16 %v1123
        %v1172 = vunpack.c.l.b16 %v1124
        %v1173 = vpack.c.b16 %v1170, %v1169
        %v1174 = vpack.c.b16 %v1172, %v1171
        %1177 = vmatprep.subr.bf16.mxu0 0
        %1178 = vmatpush1.bf16.msra.mxu0 0
        %1179 = vmatprep.subr.bf16.mxu0 0
        %1180 = vmatpush1.bf16.msra.mxu0 0
        %1181 = vmatprep.subr.bf16.mxu0 0
        %1182 = vmatpush1.bf16.msra.mxu0 0
        %1183 = vmatprep.subr.bf16.mxu0 0
        %1184 = vmatpush1.bf16.msra.mxu0 0
        %1185 = vmatprep.subr.bf16.mxu0 0
        %1186 = vmatpush1.bf16.msra.mxu0 0
        %1187 = vmatprep.subr.bf16.mxu0 0
        %1188 = vmatpush1.bf16.msra.mxu0 0
        %1189 = vmatprep.subr.bf16.mxu0 0
        %1190 = vmatpush1.bf16.msra.mxu0 %v1174
        %1191 = vmatprep.subr.bf16.mxu0 0
        %1192 = vmatpush1.bf16.msra.mxu0 %v1173
        %1193 = vmatprep.subr.bf16.mxu0 0
        %1194 = vmatpush2.bf16.msra.mxu0 0
        %1195 = vmatprep.subr.bf16.mxu0 0
        %1196 = vmatpush2.bf16.msra.mxu0 0
        %1197 = vmatprep.subr.bf16.mxu0 0
        %1198 = vmatpush2.bf16.msra.mxu0 0
        %1199 = vmatprep.subr.bf16.mxu0 0
        %1200 = vmatpush2.bf16.msra.mxu0 0
        %1201 = vmatprep.subr.bf16.mxu0 0
        %1202 = vmatpush2.bf16.msra.mxu0 0
        %1203 = vmatprep.subr.bf16.mxu0 0
        %1204 = vmatpush2.bf16.msra.mxu0 0
        %1205 = vmatprep.subr.bf16.mxu0 0
        %1206 = vmatpush2.bf16.msra.mxu0 0
        %1207 = vmatprep.subr.bf16.mxu0 0
        %1208 = vmatpush2.bf16.msra.mxu0 0
        %1209 = vmatprep.mubr.bf16.mxu0 0
        %1210 = vmatmul.mubr.bf16.gmra.mxu0 %v923
        %v1211 = vpop.f32.mrf.mxu0
        %v1212 = vadd.f32 %v1148, %v1211
        %v1213 = vpop.f32.mrf.mxu0
        %v1214 = vpop.f32.mrf.mxu0
        %v1215 = vpop.f32.mrf.mxu0
        %1216 = vdwg.mxu0
        %v1221 = vunpack.c.l.b16 %v1125
        %v1222 = vunpack.c.l.b16 %v1126
        %v1223 = vunpack.c.l.b16 %v1127
        %v1224 = vunpack.c.l.b16 %v1128
        %v1225 = vpack.c.b16 %v1222, %v1221
        %v1226 = vpack.c.b16 %v1224, %v1223
        %1229 = vmatprep.subr.bf16.mxu0 0
        %1230 = vmatpush1.bf16.msra.mxu0 0
        %1231 = vmatprep.subr.bf16.mxu0 0
        %1232 = vmatpush1.bf16.msra.mxu0 0
        %1233 = vmatprep.subr.bf16.mxu0 0
        %1234 = vmatpush1.bf16.msra.mxu0 0
        %1235 = vmatprep.subr.bf16.mxu0 0
        %1236 = vmatpush1.bf16.msra.mxu0 0
        %1237 = vmatprep.subr.bf16.mxu0 0
        %1238 = vmatpush1.bf16.msra.mxu0 0
        %1239 = vmatprep.subr.bf16.mxu0 0
        %1240 = vmatpush1.bf16.msra.mxu0 0
        %1241 = vmatprep.subr.bf16.mxu0 0
        %1242 = vmatpush1.bf16.msra.mxu0 %v1226
        %1243 = vmatprep.subr.bf16.mxu0 0
        %1244 = vmatpush1.bf16.msra.mxu0 %v1225
        %1245 = vmatprep.subr.bf16.mxu0 0
        %1246 = vmatpush2.bf16.msra.mxu0 0
        %1247 = vmatprep.subr.bf16.mxu0 0
        %1248 = vmatpush2.bf16.msra.mxu0 0
        %1249 = vmatprep.subr.bf16.mxu0 0
        %1250 = vmatpush2.bf16.msra.mxu0 0
        %1251 = vmatprep.subr.bf16.mxu0 0
        %1252 = vmatpush2.bf16.msra.mxu0 0
        %1253 = vmatprep.subr.bf16.mxu0 0
        %1254 = vmatpush2.bf16.msra.mxu0 0
        %1255 = vmatprep.subr.bf16.mxu0 0
        %1256 = vmatpush2.bf16.msra.mxu0 0
        %1257 = vmatprep.subr.bf16.mxu0 0
        %1258 = vmatpush2.bf16.msra.mxu0 0
        %1259 = vmatprep.subr.bf16.mxu0 0
        %1260 = vmatpush2.bf16.msra.mxu0 0
        %1261 = vmatprep.mubr.bf16.mxu0 0
        %1262 = vmatmul.mubr.bf16.gmra.mxu0 %v923
        %v1263 = vpop.f32.mrf.mxu0
        %v1264 = vadd.f32 %v1152, %v1263
        %v1265 = vpop.f32.mrf.mxu0
        %v1266 = vpop.f32.mrf.mxu0
        %v1267 = vpop.f32.mrf.mxu0
        %1268 = vdwg.mxu0
        %v1273 = vunpack.c.l.b16 %v1129
        %v1274 = vunpack.c.l.b16 %v1130
        %v1275 = vunpack.c.l.b16 %v1131
        %v1276 = vunpack.c.l.b16 %v1132
        %v1277 = vpack.c.b16 %v1274, %v1273
        %v1278 = vpack.c.b16 %v1276, %v1275
        %1281 = vmatprep.subr.bf16.mxu0 0
        %1282 = vmatpush1.bf16.msra.mxu0 0
        %1283 = vmatprep.subr.bf16.mxu0 0
        %1284 = vmatpush1.bf16.msra.mxu0 0
        %1285 = vmatprep.subr.bf16.mxu0 0
        %1286 = vmatpush1.bf16.msra.mxu0 0
        %1287 = vmatprep.subr.bf16.mxu0 0
        %1288 = vmatpush1.bf16.msra.mxu0 0
        %1289 = vmatprep.subr.bf16.mxu0 0
        %1290 = vmatpush1.bf16.msra.mxu0 0
        %1291 = vmatprep.subr.bf16.mxu0 0
        %1292 = vmatpush1.bf16.msra.mxu0 0
        %1293 = vmatprep.subr.bf16.mxu0 0
        %1294 = vmatpush1.bf16.msra.mxu0 %v1278
        %1295 = vmatprep.subr.bf16.mxu0 0
        %1296 = vmatpush1.bf16.msra.mxu0 %v1277
        %1297 = vmatprep.subr.bf16.mxu0 0
        %1298 = vmatpush2.bf16.msra.mxu0 0
        %1299 = vmatprep.subr.bf16.mxu0 0
        %1300 = vmatpush2.bf16.msra.mxu0 0
        %1301 = vmatprep.subr.bf16.mxu0 0
        %1302 = vmatpush2.bf16.msra.mxu0 0
        %1303 = vmatprep.subr.bf16.mxu0 0
        %1304 = vmatpush2.bf16.msra.mxu0 0
        %1305 = vmatprep.subr.bf16.mxu0 0
        %1306 = vmatpush2.bf16.msra.mxu0 0
        %1307 = vmatprep.subr.bf16.mxu0 0
        %1308 = vmatpush2.bf16.msra.mxu0 0
        %1309 = vmatprep.subr.bf16.mxu0 0
        %1310 = vmatpush2.bf16.msra.mxu0 0
        %1311 = vmatprep.subr.bf16.mxu0 0
        %1312 = vmatpush2.bf16.msra.mxu0 0
        %1313 = vmatprep.mubr.bf16.mxu0 0
        %1314 = vmatmul.mubr.bf16.gmra.mxu0 %v923
        %v1315 = vpop.f32.mrf.mxu0
        %v1316 = vadd.f32 %v1156, %v1315
        %v1317 = vpop.f32.mrf.mxu0
        %v1318 = vpop.f32.mrf.mxu0
        %v1319 = vpop.f32.mrf.mxu0
        %1320 = vdwg.mxu0
        %v1325 = vunpack.c.l.b16 %v1133
        %v1326 = vunpack.c.l.b16 %v1134
        %v1327 = vunpack.c.l.b16 %v1135
        %v1328 = vunpack.c.l.b16 %v1136
        %v1329 = vpack.c.b16 %v1326, %v1325
        %v1330 = vpack.c.b16 %v1328, %v1327
        %1333 = vmatprep.subr.bf16.mxu0 0
        %1334 = vmatpush1.bf16.msra.mxu0 0
        %1335 = vmatprep.subr.bf16.mxu0 0
        %1336 = vmatpush1.bf16.msra.mxu0 0
        %1337 = vmatprep.subr.bf16.mxu0 0
        %1338 = vmatpush1.bf16.msra.mxu0 0
        %1339 = vmatprep.subr.bf16.mxu0 0
        %1340 = vmatpush1.bf16.msra.mxu0 0
        %1341 = vmatprep.subr.bf16.mxu0 0
        %1342 = vmatpush1.bf16.msra.mxu0 0
        %1343 = vmatprep.subr.bf16.mxu0 0
        %1344 = vmatpush1.bf16.msra.mxu0 0
        %1345 = vmatprep.subr.bf16.mxu0 0
        %1346 = vmatpush1.bf16.msra.mxu0 %v1330
        %1347 = vmatprep.subr.bf16.mxu0 0
        %1348 = vmatpush1.bf16.msra.mxu0 %v1329
        %1349 = vmatprep.subr.bf16.mxu0 0
        %1350 = vmatpush2.bf16.msra.mxu0 0
        %1351 = vmatprep.subr.bf16.mxu0 0
        %1352 = vmatpush2.bf16.msra.mxu0 0
        %1353 = vmatprep.subr.bf16.mxu0 0
        %1354 = vmatpush2.bf16.msra.mxu0 0
        %1355 = vmatprep.subr.bf16.mxu0 0
        %1356 = vmatpush2.bf16.msra.mxu0 0
        %1357 = vmatprep.subr.bf16.mxu0 0
        %1358 = vmatpush2.bf16.msra.mxu0 0
        %1359 = vmatprep.subr.bf16.mxu0 0
        %1360 = vmatpush2.bf16.msra.mxu0 0
        %1361 = vmatprep.subr.bf16.mxu0 0
        %1362 = vmatpush2.bf16.msra.mxu0 0
        %1363 = vmatprep.subr.bf16.mxu0 0
        %1364 = vmatpush2.bf16.msra.mxu0 0
        %1365 = vmatprep.mubr.bf16.mxu0 0
        %1366 = vmatmul.mubr.bf16.gmra.mxu0 %v923
        %v1367 = vpop.f32.mrf.mxu0
        %v1368 = vadd.f32 %v1160, %v1367
        %v1369 = vpop.f32.mrf.mxu0
        %v1370 = vpop.f32.mrf.mxu0
        %v1371 = vpop.f32.mrf.mxu0
        %1372 = vdwg.mxu0
        %v1373 = vld [vmem:[%s790] sm:$0xf]
        %v1374 = vld [vmem:[%s790 + $0x4] sm:$0xf]
        %v1375 = vld [vmem:[%s790 + $0x8] sm:$0xf]
        %v1376 = vld [vmem:[%s790 + $0xc] sm:$0xf]
        %v1377 = vld [vmem:[%s790 + $0x10] sm:$0xf]
        %v1378 = vld [vmem:[%s790 + $0x14] sm:$0xf]
        %v1379 = vld [vmem:[%s790 + $0x18] sm:$0xf]
        %v1380 = vld [vmem:[%s790 + $0x1c] sm:$0xf]
        %v1381 = vld [vmem:[%s790 + $0x20] sm:$0xf]
        %v1382 = vld [vmem:[%s790 + $0x24] sm:$0xf]
        %v1383 = vld [vmem:[%s790 + $0x28] sm:$0xf]
        %v1384 = vld [vmem:[%s790 + $0x2c] sm:$0xf]
        %v1385 = vld [vmem:[%s790 + $0x30] sm:$0xf]
        %v1386 = vld [vmem:[%s790 + $0x34] sm:$0xf]
        %v1387 = vld [vmem:[%s790 + $0x38] sm:$0xf]
        %v1388 = vld [vmem:[%s790 + $0x3c] sm:$0xf]
        %v1389 = vld [vmem:[%s794] sm:$0x1]
        %v1390 = vld [vmem:[%s794 + $0x1] sm:$0x1]
        %v1391 = vld [vmem:[%s794 + $0x2] sm:$0x1]
        %v1392 = vld [vmem:[%s794 + $0x3] sm:$0x1]
        %v1397 = vlaneseq
        %v1398 = vshrl.u32 %v1397, 7
        %v1399 = vsub.s32 0, %v1398
        %v1400 = vrot.slane %v1389, %v1399
        %v1401 = vlaneseq
        %v1402 = vshrl.u32 %v1401, 7
        %v1403 = vsub.s32 0, %v1402
        %v1404 = vrot.slane %v1390, %v1403
        %v1405 = vlaneseq
        %v1406 = vshrl.u32 %v1405, 7
        %v1407 = vsub.s32 0, %v1406
        %v1408 = vrot.slane %v1391, %v1407
        %v1409 = vlaneseq
        %v1410 = vshrl.u32 %v1409, 7
        %v1411 = vsub.s32 0, %v1410
        %v1412 = vrot.slane %v1392, %v1411
        %v1421 = vunpack.c.l.b16 %v1373
        %v1422 = vunpack.c.l.b16 %v1374
        %v1423 = vunpack.c.l.b16 %v1375
        %v1424 = vunpack.c.l.b16 %v1376
        %v1425 = vpack.c.b16 %v1422, %v1421
        %v1426 = vpack.c.b16 %v1424, %v1423
        %1429 = vmatprep.subr.bf16.mxu0 0
        %1430 = vmatpush1.bf16.msra.mxu0 0
        %1431 = vmatprep.subr.bf16.mxu0 0
        %1432 = vmatpush1.bf16.msra.mxu0 0
        %1433 = vmatprep.subr.bf16.mxu0 0
        %1434 = vmatpush1.bf16.msra.mxu0 0
        %1435 = vmatprep.subr.bf16.mxu0 0
        %1436 = vmatpush1.bf16.msra.mxu0 0
        %1437 = vmatprep.subr.bf16.mxu0 0
        %1438 = vmatpush1.bf16.msra.mxu0 0
        %1439 = vmatprep.subr.bf16.mxu0 0
        %1440 = vmatpush1.bf16.msra.mxu0 0
        %1441 = vmatprep.subr.bf16.mxu0 0
        %1442 = vmatpush1.bf16.msra.mxu0 %v1426
        %1443 = vmatprep.subr.bf16.mxu0 0
        %1444 = vmatpush1.bf16.msra.mxu0 %v1425
        %1445 = vmatprep.subr.bf16.mxu0 0
        %1446 = vmatpush2.bf16.msra.mxu0 0
        %1447 = vmatprep.subr.bf16.mxu0 0
        %1448 = vmatpush2.bf16.msra.mxu0 0
        %1449 = vmatprep.subr.bf16.mxu0 0
        %1450 = vmatpush2.bf16.msra.mxu0 0
        %1451 = vmatprep.subr.bf16.mxu0 0
        %1452 = vmatpush2.bf16.msra.mxu0 0
        %1453 = vmatprep.subr.bf16.mxu0 0
        %1454 = vmatpush2.bf16.msra.mxu0 0
        %1455 = vmatprep.subr.bf16.mxu0 0
        %1456 = vmatpush2.bf16.msra.mxu0 0
        %1457 = vmatprep.subr.bf16.mxu0 0
        %1458 = vmatpush2.bf16.msra.mxu0 0
        %1459 = vmatprep.subr.bf16.mxu0 0
        %1460 = vmatpush2.bf16.msra.mxu0 0
        %1461 = vmatprep.mubr.bf16.mxu0 0
        %1462 = vmatmul.mubr.bf16.gmra.mxu0 %v923
        %v1463 = vpop.f32.mrf.mxu0
        %v1464 = vadd.f32 %v1400, %v1463
        %v1465 = vpop.f32.mrf.mxu0
        %v1466 = vpop.f32.mrf.mxu0
        %v1467 = vpop.f32.mrf.mxu0
        %1468 = vdwg.mxu0
        %v1473 = vunpack.c.l.b16 %v1377
        %v1474 = vunpack.c.l.b16 %v1378
        %v1475 = vunpack.c.l.b16 %v1379
        %v1476 = vunpack.c.l.b16 %v1380
        %v1477 = vpack.c.b16 %v1474, %v1473
        %v1478 = vpack.c.b16 %v1476, %v1475
        %1481 = vmatprep.subr.bf16.mxu0 0
        %1482 = vmatpush1.bf16.msra.mxu0 0
        %1483 = vmatprep.subr.bf16.mxu0 0
        %1484 = vmatpush1.bf16.msra.mxu0 0
        %1485 = vmatprep.subr.bf16.mxu0 0
        %1486 = vmatpush1.bf16.msra.mxu0 0
        %1487 = vmatprep.subr.bf16.mxu0 0
        %1488 = vmatpush1.bf16.msra.mxu0 0
        %1489 = vmatprep.subr.bf16.mxu0 0
        %1490 = vmatpush1.bf16.msra.mxu0 0
        %1491 = vmatprep.subr.bf16.mxu0 0
        %1492 = vmatpush1.bf16.msra.mxu0 0
        %1493 = vmatprep.subr.bf16.mxu0 0
        %1494 = vmatpush1.bf16.msra.mxu0 %v1478
        %1495 = vmatprep.subr.bf16.mxu0 0
        %1496 = vmatpush1.bf16.msra.mxu0 %v1477
        %1497 = vmatprep.subr.bf16.mxu0 0
        %1498 = vmatpush2.bf16.msra.mxu0 0
        %1499 = vmatprep.subr.bf16.mxu0 0
        %1500 = vmatpush2.bf16.msra.mxu0 0
        %1501 = vmatprep.subr.bf16.mxu0 0
        %1502 = vmatpush2.bf16.msra.mxu0 0
        %1503 = vmatprep.subr.bf16.mxu0 0
        %1504 = vmatpush2.bf16.msra.mxu0 0
        %1505 = vmatprep.subr.bf16.mxu0 0
        %1506 = vmatpush2.bf16.msra.mxu0 0
        %1507 = vmatprep.subr.bf16.mxu0 0
        %1508 = vmatpush2.bf16.msra.mxu0 0
        %1509 = vmatprep.subr.bf16.mxu0 0
        %1510 = vmatpush2.bf16.msra.mxu0 0
        %1511 = vmatprep.subr.bf16.mxu0 0
        %1512 = vmatpush2.bf16.msra.mxu0 0
        %1513 = vmatprep.mubr.bf16.mxu0 0
        %1514 = vmatmul.mubr.bf16.gmra.mxu0 %v923
        %v1515 = vpop.f32.mrf.mxu0
        %v1516 = vadd.f32 %v1404, %v1515
        %v1517 = vpop.f32.mrf.mxu0
        %v1518 = vpop.f32.mrf.mxu0
        %v1519 = vpop.f32.mrf.mxu0
        %1520 = vdwg.mxu0
        %v1525 = vunpack.c.l.b16 %v1381
        %v1526 = vunpack.c.l.b16 %v1382
        %v1527 = vunpack.c.l.b16 %v1383
        %v1528 = vunpack.c.l.b16 %v1384
        %v1529 = vpack.c.b16 %v1526, %v1525
        %v1530 = vpack.c.b16 %v1528, %v1527
        %1533 = vmatprep.subr.bf16.mxu0 0
        %1534 = vmatpush1.bf16.msra.mxu0 0
        %1535 = vmatprep.subr.bf16.mxu0 0
        %1536 = vmatpush1.bf16.msra.mxu0 0
        %1537 = vmatprep.subr.bf16.mxu0 0
        %1538 = vmatpush1.bf16.msra.mxu0 0
        %1539 = vmatprep.subr.bf16.mxu0 0
        %1540 = vmatpush1.bf16.msra.mxu0 0
        %1541 = vmatprep.subr.bf16.mxu0 0
        %1542 = vmatpush1.bf16.msra.mxu0 0
        %1543 = vmatprep.subr.bf16.mxu0 0
        %1544 = vmatpush1.bf16.msra.mxu0 0
        %1545 = vmatprep.subr.bf16.mxu0 0
        %1546 = vmatpush1.bf16.msra.mxu0 %v1530
        %1547 = vmatprep.subr.bf16.mxu0 0
        %1548 = vmatpush1.bf16.msra.mxu0 %v1529
        %1549 = vmatprep.subr.bf16.mxu0 0
        %1550 = vmatpush2.bf16.msra.mxu0 0
        %1551 = vmatprep.subr.bf16.mxu0 0
        %1552 = vmatpush2.bf16.msra.mxu0 0
        %1553 = vmatprep.subr.bf16.mxu0 0
        %1554 = vmatpush2.bf16.msra.mxu0 0
        %1555 = vmatprep.subr.bf16.mxu0 0
        %1556 = vmatpush2.bf16.msra.mxu0 0
        %1557 = vmatprep.subr.bf16.mxu0 0
        %1558 = vmatpush2.bf16.msra.mxu0 0
        %1559 = vmatprep.subr.bf16.mxu0 0
        %1560 = vmatpush2.bf16.msra.mxu0 0
        %1561 = vmatprep.subr.bf16.mxu0 0
        %1562 = vmatpush2.bf16.msra.mxu0 0
        %1563 = vmatprep.subr.bf16.mxu0 0
        %1564 = vmatpush2.bf16.msra.mxu0 0
        %1565 = vmatprep.mubr.bf16.mxu0 0
        %1566 = vmatmul.mubr.bf16.gmra.mxu0 %v923
        %v1567 = vpop.f32.mrf.mxu0
        %v1568 = vadd.f32 %v1408, %v1567
        %v1569 = vpop.f32.mrf.mxu0
        %v1570 = vpop.f32.mrf.mxu0
        %v1571 = vpop.f32.mrf.mxu0
        %1572 = vdwg.mxu0
        %v1577 = vunpack.c.l.b16 %v1385
        %v1578 = vunpack.c.l.b16 %v1386
        %v1579 = vunpack.c.l.b16 %v1387
        %v1580 = vunpack.c.l.b16 %v1388
        %v1581 = vpack.c.b16 %v1578, %v1577
        %v1582 = vpack.c.b16 %v1580, %v1579
        %1585 = vmatprep.subr.bf16.mxu0 0
        %1586 = vmatpush1.bf16.msra.mxu0 0
        %1587 = vmatprep.subr.bf16.mxu0 0
        %1588 = vmatpush1.bf16.msra.mxu0 0
        %1589 = vmatprep.subr.bf16.mxu0 0
        %1590 = vmatpush1.bf16.msra.mxu0 0
        %1591 = vmatprep.subr.bf16.mxu0 0
        %1592 = vmatpush1.bf16.msra.mxu0 0
        %1593 = vmatprep.subr.bf16.mxu0 0
        %1594 = vmatpush1.bf16.msra.mxu0 0
        %1595 = vmatprep.subr.bf16.mxu0 0
        %1596 = vmatpush1.bf16.msra.mxu0 0
        %1597 = vmatprep.subr.bf16.mxu0 0
        %1598 = vmatpush1.bf16.msra.mxu0 %v1582
        %1599 = vmatprep.subr.bf16.mxu0 0
        %1600 = vmatpush1.bf16.msra.mxu0 %v1581
        %1601 = vmatprep.subr.bf16.mxu0 0
        %1602 = vmatpush2.bf16.msra.mxu0 0
        %1603 = vmatprep.subr.bf16.mxu0 0
        %1604 = vmatpush2.bf16.msra.mxu0 0
        %1605 = vmatprep.subr.bf16.mxu0 0
        %1606 = vmatpush2.bf16.msra.mxu0 0
        %1607 = vmatprep.subr.bf16.mxu0 0
        %1608 = vmatpush2.bf16.msra.mxu0 0
        %1609 = vmatprep.subr.bf16.mxu0 0
        %1610 = vmatpush2.bf16.msra.mxu0 0
        %1611 = vmatprep.subr.bf16.mxu0 0
        %1612 = vmatpush2.bf16.msra.mxu0 0
        %1613 = vmatprep.subr.bf16.mxu0 0
        %1614 = vmatpush2.bf16.msra.mxu0 0
        %1615 = vmatprep.subr.bf16.mxu0 0
        %1616 = vmatpush2.bf16.msra.mxu0 0
        %1617 = vmatprep.mubr.bf16.mxu0 0
        %1618 = vmatmul.mubr.bf16.gmra.mxu0 %v923
        %v1619 = vpop.f32.mrf.mxu0
        %v1620 = vadd.f32 %v1412, %v1619
        %v1621 = vpop.f32.mrf.mxu0
        %v1622 = vpop.f32.mrf.mxu0
        %v1623 = vpop.f32.mrf.mxu0
        %1624 = vdwg.mxu0
        %v1625 = vpack.c.bf16 %v960, %v960
        %v1626 = vpack.c.bf16 %v1012, %v1012
        %v1627 = vpack.c.bf16 %v1064, %v1064
        %v1628 = vpack.c.bf16 %v1116, %v1116
        %v1629 = vpack.c.bf16 %v1212, %v1212
        %v1630 = vpack.c.bf16 %v1264, %v1264
        %v1631 = vpack.c.bf16 %v1316, %v1316
        %v1632 = vpack.c.bf16 %v1368, %v1368
        %vm1633 = vcmask 64512
        %v1635 = vsel %vm1633, %v1625, 0
        %v1638 = vsel %vm1633, %v1629, 0
        %1640 = vmatprep.subr.bf16.mxu0 0
        %1641 = vmatpush1.bf16.xpose.msra.mxu0 0
        %1642 = vmatprep.subr.bf16.mxu0 0
        %1643 = vmatpush1.bf16.xpose.msra.mxu0 0
        %1644 = vmatprep.subr.bf16.mxu0 0
        %1645 = vmatpush1.bf16.xpose.msra.mxu0 0
        %1646 = vmatprep.subr.bf16.mxu0 0
        %1647 = vmatpush1.bf16.xpose.msra.mxu0 0
        %1648 = vmatprep.subr.bf16.mxu0 0
        %1649 = vmatpush1.bf16.xpose.msra.mxu0 0
        %1650 = vmatprep.subr.bf16.mxu0 0
        %1651 = vmatpush1.bf16.xpose.msra.mxu0 0
        %1652 = vmatprep.subr.bf16.mxu0 0
        %1653 = vmatpush1.bf16.xpose.msra.mxu0 0
        %1654 = vmatprep.subr.bf16.mxu0 0
        %1655 = vmatpush1.bf16.xpose.msra.mxu0 %v1638
        %1656 = vmatprep.subr.bf16.mxu0 0
        %1657 = vmatpush2.bf16.xpose.msra.mxu0 0
        %1658 = vmatprep.subr.bf16.mxu0 0
        %1659 = vmatpush2.bf16.xpose.msra.mxu0 0
        %1660 = vmatprep.subr.bf16.mxu0 0
        %1661 = vmatpush2.bf16.xpose.msra.mxu0 0
        %1662 = vmatprep.subr.bf16.mxu0 0
        %1663 = vmatpush2.bf16.xpose.msra.mxu0 0
        %1664 = vmatprep.subr.bf16.mxu0 0
        %1665 = vmatpush2.bf16.xpose.msra.mxu0 0
        %1666 = vmatprep.subr.bf16.mxu0 0
        %1667 = vmatpush2.bf16.xpose.msra.mxu0 0
        %1668 = vmatprep.subr.bf16.mxu0 0
        %1669 = vmatpush2.bf16.xpose.msra.mxu0 0
        %1670 = vmatprep.subr.bf16.mxu0 0
        %1671 = vmatpush2.bf16.xpose.msra.mxu0 0
        %1672 = vmatprep.mubr.bf16.mxu0 0
        %1673 = vmatmul.mubr.bf16.gmra.mxu0 %v1635
        %v1674 = vpop.f32.mrf.mxu0
        %v1675 = vadd.f32 0.0, %v1674
        %v1676 = vpop.f32.mrf.mxu0
        %v1677 = vpop.f32.mrf.mxu0
        %v1678 = vpop.f32.mrf.mxu0
        %1679 = vdwg.mxu0
        %v1681 = vsel %vm1633, %v1626, 0
        %v1684 = vsel %vm1633, %v1630, 0
        %1686 = vmatprep.subr.bf16.mxu0 0
        %1687 = vmatpush1.bf16.xpose.msra.mxu0 0
        %1688 = vmatprep.subr.bf16.mxu0 0
        %1689 = vmatpush1.bf16.xpose.msra.mxu0 0
        %1690 = vmatprep.subr.bf16.mxu0 0
        %1691 = vmatpush1.bf16.xpose.msra.mxu0 0
        %1692 = vmatprep.subr.bf16.mxu0 0
        %1693 = vmatpush1.bf16.xpose.msra.mxu0 0
        %1694 = vmatprep.subr.bf16.mxu0 0
        %1695 = vmatpush1.bf16.xpose.msra.mxu0 0
        %1696 = vmatprep.subr.bf16.mxu0 0
        %1697 = vmatpush1.bf16.xpose.msra.mxu0 0
        %1698 = vmatprep.subr.bf16.mxu0 0
        %1699 = vmatpush1.bf16.xpose.msra.mxu0 0
        %1700 = vmatprep.subr.bf16.mxu0 0
        %1701 = vmatpush1.bf16.xpose.msra.mxu0 %v1684
        %1702 = vmatprep.subr.bf16.mxu0 0
        %1703 = vmatpush2.bf16.xpose.msra.mxu0 0
        %1704 = vmatprep.subr.bf16.mxu0 0
        %1705 = vmatpush2.bf16.xpose.msra.mxu0 0
        %1706 = vmatprep.subr.bf16.mxu0 0
        %1707 = vmatpush2.bf16.xpose.msra.mxu0 0
        %1708 = vmatprep.subr.bf16.mxu0 0
        %1709 = vmatpush2.bf16.xpose.msra.mxu0 0
        %1710 = vmatprep.subr.bf16.mxu0 0
        %1711 = vmatpush2.bf16.xpose.msra.mxu0 0
        %1712 = vmatprep.subr.bf16.mxu0 0
        %1713 = vmatpush2.bf16.xpose.msra.mxu0 0
        %1714 = vmatprep.subr.bf16.mxu0 0
        %1715 = vmatpush2.bf16.xpose.msra.mxu0 0
        %1716 = vmatprep.subr.bf16.mxu0 0
        %1717 = vmatpush2.bf16.xpose.msra.mxu0 0
        %1718 = vmatprep.mubr.bf16.mxu0 0
        %1719 = vmatmul.mubr.bf16.gmra.mxu0 %v1681
        %v1720 = vpop.f32.mrf.mxu0
        %v1721 = vadd.f32 0.0, %v1720
        %v1722 = vpop.f32.mrf.mxu0
        %v1723 = vpop.f32.mrf.mxu0
        %v1724 = vpop.f32.mrf.mxu0
        %1725 = vdwg.mxu0
        %v1727 = vsel %vm1633, %v1627, 0
        %v1730 = vsel %vm1633, %v1631, 0
        %1732 = vmatprep.subr.bf16.mxu0 0
        %1733 = vmatpush1.bf16.xpose.msra.mxu0 0
        %1734 = vmatprep.subr.bf16.mxu0 0
        %1735 = vmatpush1.bf16.xpose.msra.mxu0 0
        %1736 = vmatprep.subr.bf16.mxu0 0
        %1737 = vmatpush1.bf16.xpose.msra.mxu0 0
        %1738 = vmatprep.subr.bf16.mxu0 0
        %1739 = vmatpush1.bf16.xpose.msra.mxu0 0
        %1740 = vmatprep.subr.bf16.mxu0 0
        %1741 = vmatpush1.bf16.xpose.msra.mxu0 0
        %1742 = vmatprep.subr.bf16.mxu0 0
        %1743 = vmatpush1.bf16.xpose.msra.mxu0 0
        %1744 = vmatprep.subr.bf16.mxu0 0
        %1745 = vmatpush1.bf16.xpose.msra.mxu0 0
        %1746 = vmatprep.subr.bf16.mxu0 0
        %1747 = vmatpush1.bf16.xpose.msra.mxu0 %v1730
        %1748 = vmatprep.subr.bf16.mxu0 0
        %1749 = vmatpush2.bf16.xpose.msra.mxu0 0
        %1750 = vmatprep.subr.bf16.mxu0 0
        %1751 = vmatpush2.bf16.xpose.msra.mxu0 0
        %1752 = vmatprep.subr.bf16.mxu0 0
        %1753 = vmatpush2.bf16.xpose.msra.mxu0 0
        %1754 = vmatprep.subr.bf16.mxu0 0
        %1755 = vmatpush2.bf16.xpose.msra.mxu0 0
        %1756 = vmatprep.subr.bf16.mxu0 0
        %1757 = vmatpush2.bf16.xpose.msra.mxu0 0
        %1758 = vmatprep.subr.bf16.mxu0 0
        %1759 = vmatpush2.bf16.xpose.msra.mxu0 0
        %1760 = vmatprep.subr.bf16.mxu0 0
        %1761 = vmatpush2.bf16.xpose.msra.mxu0 0
        %1762 = vmatprep.subr.bf16.mxu0 0
        %1763 = vmatpush2.bf16.xpose.msra.mxu0 0
        %1764 = vmatprep.mubr.bf16.mxu0 0
        %1765 = vmatmul.mubr.bf16.gmra.mxu0 %v1727
        %v1766 = vpop.f32.mrf.mxu0
        %v1767 = vadd.f32 0.0, %v1766
        %v1768 = vpop.f32.mrf.mxu0
        %v1769 = vpop.f32.mrf.mxu0
        %v1770 = vpop.f32.mrf.mxu0
        %1771 = vdwg.mxu0
        %v1773 = vsel %vm1633, %v1628, 0
        %v1776 = vsel %vm1633, %v1632, 0
        %1778 = vmatprep.subr.bf16.mxu0 0
        %1779 = vmatpush1.bf16.xpose.msra.mxu0 0
        %1780 = vmatprep.subr.bf16.mxu0 0
        %1781 = vmatpush1.bf16.xpose.msra.mxu0 0
        %1782 = vmatprep.subr.bf16.mxu0 0
        %1783 = vmatpush1.bf16.xpose.msra.mxu0 0
        %1784 = vmatprep.subr.bf16.mxu0 0
        %1785 = vmatpush1.bf16.xpose.msra.mxu0 0
        %1786 = vmatprep.subr.bf16.mxu0 0
        %1787 = vmatpush1.bf16.xpose.msra.mxu0 0
        %1788 = vmatprep.subr.bf16.mxu0 0
        %1789 = vmatpush1.bf16.xpose.msra.mxu0 0
        %1790 = vmatprep.subr.bf16.mxu0 0
        %1791 = vmatpush1.bf16.xpose.msra.mxu0 0
        %1792 = vmatprep.subr.bf16.mxu0 0
        %1793 = vmatpush1.bf16.xpose.msra.mxu0 %v1776
        %1794 = vmatprep.subr.bf16.mxu0 0
        %1795 = vmatpush2.bf16.xpose.msra.mxu0 0
        %1796 = vmatprep.subr.bf16.mxu0 0
        %1797 = vmatpush2.bf16.xpose.msra.mxu0 0
        %1798 = vmatprep.subr.bf16.mxu0 0
        %1799 = vmatpush2.bf16.xpose.msra.mxu0 0
        %1800 = vmatprep.subr.bf16.mxu0 0
        %1801 = vmatpush2.bf16.xpose.msra.mxu0 0
        %1802 = vmatprep.subr.bf16.mxu0 0
        %1803 = vmatpush2.bf16.xpose.msra.mxu0 0
        %1804 = vmatprep.subr.bf16.mxu0 0
        %1805 = vmatpush2.bf16.xpose.msra.mxu0 0
        %1806 = vmatprep.subr.bf16.mxu0 0
        %1807 = vmatpush2.bf16.xpose.msra.mxu0 0
        %1808 = vmatprep.subr.bf16.mxu0 0
        %1809 = vmatpush2.bf16.xpose.msra.mxu0 0
        %1810 = vmatprep.mubr.bf16.mxu0 0
        %1811 = vmatmul.mubr.bf16.gmra.mxu0 %v1773
        %v1812 = vpop.f32.mrf.mxu0
        %v1813 = vadd.f32 0.0, %v1812
        %v1814 = vpop.f32.mrf.mxu0
        %v1815 = vpop.f32.mrf.mxu0
        %v1816 = vpop.f32.mrf.mxu0
        %1817 = vdwg.mxu0
        %v1818 = vsel %vm1633, %v1675, -inf
        %1819 = vmax.xlane.f32.xlu0 %v1818
        %v1820 = vpop.xlane.xlu0 %1819
        %v1821 = vsel %vm1633, %v1721, -inf
        %1822 = vmax.xlane.f32.xlu0 %v1821
        %v1823 = vpop.xlane.xlu0 %1822
        %v1824 = vsel %vm1633, %v1767, -inf
        %1825 = vmax.xlane.f32.xlu0 %v1824
        %v1826 = vpop.xlane.xlu0 %1825
        %v1827 = vsel %vm1633, %v1813, -inf
        %1828 = vmax.xlane.f32.xlu0 %v1827
        %v1829 = vpop.xlane.xlu0 %1828
        %v1830 = vsub.f32 %v1675, %v1820
        %v1831 = vsub.f32 %v1721, %v1823
        %v1832 = vsub.f32 %v1767, %v1826
        %v1833 = vsub.f32 %v1813, %v1829
        %v1834 = vmul.f32 %v1830, 1.442695
        %v1835 = vpow.pop %v1834
        %v1836 = vmul.f32 %v1831, 1.442695
        %v1837 = vpow.pop %v1836
        %v1838 = vmul.f32 %v1832, 1.442695
        %v1839 = vpow.pop %v1838
        %v1840 = vmul.f32 %v1833, 1.442695
        %v1841 = vpow.pop %v1840
        %v1842 = vsel %vm1633, %v1835, 0.0
        %1843 = vadd.xlane.f32.xlu0 %v1842
        %v1844 = vpop.xlane.xlu0 %1843
        %v1845 = vsel %vm1633, %v1837, 0.0
        %1846 = vadd.xlane.f32.xlu0 %v1845
        %v1847 = vpop.xlane.xlu0 %1846
        %v1848 = vsel %vm1633, %v1839, 0.0
        %1849 = vadd.xlane.f32.xlu0 %v1848
        %v1850 = vpop.xlane.xlu0 %1849
        %v1851 = vsel %vm1633, %v1841, 0.0
        %1852 = vadd.xlane.f32.xlu0 %v1851
        %v1853 = vpop.xlane.xlu0 %1852
        %v1854 = vrcp.pop %v1844
        %v1855 = vrcp.pop %v1847
        %v1856 = vrcp.pop %v1850
        %v1857 = vrcp.pop %v1853
        %v1858 = vmul.f32 %v1835, %v1854
        %v1859 = vmul.f32 %v1837, %v1855
        %v1860 = vmul.f32 %v1839, %v1856
        %v1861 = vmul.f32 %v1841, %v1857
        %v1862 = vpack.c.bf16 %v1858, %v1858
        %v1863 = vpack.c.bf16 %v1859, %v1859
        %v1864 = vpack.c.bf16 %v1860, %v1860
        %v1865 = vpack.c.bf16 %v1861, %v1861
        %v1866 = vpack.c.bf16 %v1464, %v1464
        %v1867 = vpack.c.bf16 %v1516, %v1516
        %v1868 = vpack.c.bf16 %v1568, %v1568
        %v1869 = vpack.c.bf16 %v1620, %v1620
        %v1871 = vsel %vm1633, %v1862, 0
        %vm1873 = vcmask 1043456
        %v1875 = vsel %vm1873, %v1866, 0
        %1877 = vmatprep.subr.bf16.mxu0 0
        %1878 = vmatpush1.bf16.msra.mxu0 0
        %1879 = vmatprep.subr.bf16.mxu0 0
        %1880 = vmatpush1.bf16.msra.mxu0 0
        %1881 = vmatprep.subr.bf16.mxu0 0
        %1882 = vmatpush1.bf16.msra.mxu0 0
        %1883 = vmatprep.subr.bf16.mxu0 0
        %1884 = vmatpush1.bf16.msra.mxu0 0
        %1885 = vmatprep.subr.bf16.mxu0 0
        %1886 = vmatpush1.bf16.msra.mxu0 0
        %1887 = vmatprep.subr.bf16.mxu0 0
        %1888 = vmatpush1.bf16.msra.mxu0 0
        %1889 = vmatprep.subr.bf16.mxu0 0
        %1890 = vmatpush1.bf16.msra.mxu0 0
        %1891 = vmatprep.subr.bf16.mxu0 0
        %1892 = vmatpush1.bf16.msra.mxu0 %v1875
        %1893 = vmatprep.subr.bf16.mxu0 0
        %1894 = vmatpush2.bf16.msra.mxu0 0
        %1895 = vmatprep.subr.bf16.mxu0 0
        %1896 = vmatpush2.bf16.msra.mxu0 0
        %1897 = vmatprep.subr.bf16.mxu0 0
        %1898 = vmatpush2.bf16.msra.mxu0 0
        %1899 = vmatprep.subr.bf16.mxu0 0
        %1900 = vmatpush2.bf16.msra.mxu0 0
        %1901 = vmatprep.subr.bf16.mxu0 0
        %1902 = vmatpush2.bf16.msra.mxu0 0
        %1903 = vmatprep.subr.bf16.mxu0 0
        %1904 = vmatpush2.bf16.msra.mxu0 0
        %1905 = vmatprep.subr.bf16.mxu0 0
        %1906 = vmatpush2.bf16.msra.mxu0 0
        %1907 = vmatprep.subr.bf16.mxu0 0
        %1908 = vmatpush2.bf16.msra.mxu0 0
        %1909 = vmatprep.mubr.bf16.mxu0 0
        %1910 = vmatmul.mubr.bf16.gmra.mxu0 %v1871
        %v1911 = vpop.f32.mrf.mxu0
        %v1912 = vadd.f32 0.0, %v1911
        %v1913 = vpop.f32.mrf.mxu0
        %v1914 = vpop.f32.mrf.mxu0
        %v1915 = vpop.f32.mrf.mxu0
        %1916 = vdwg.mxu0
        %v1918 = vsel %vm1633, %v1863, 0
        %v1921 = vsel %vm1873, %v1867, 0
        %1923 = vmatprep.subr.bf16.mxu0 0
        %1924 = vmatpush1.bf16.msra.mxu0 0
        %1925 = vmatprep.subr.bf16.mxu0 0
        %1926 = vmatpush1.bf16.msra.mxu0 0
        %1927 = vmatprep.subr.bf16.mxu0 0
        %1928 = vmatpush1.bf16.msra.mxu0 0
        %1929 = vmatprep.subr.bf16.mxu0 0
        %1930 = vmatpush1.bf16.msra.mxu0 0
        %1931 = vmatprep.subr.bf16.mxu0 0
        %1932 = vmatpush1.bf16.msra.mxu0 0
        %1933 = vmatprep.subr.bf16.mxu0 0
        %1934 = vmatpush1.bf16.msra.mxu0 0
        %1935 = vmatprep.subr.bf16.mxu0 0
        %1936 = vmatpush1.bf16.msra.mxu0 0
        %1937 = vmatprep.subr.bf16.mxu0 0
        %1938 = vmatpush1.bf16.msra.mxu0 %v1921
        %1939 = vmatprep.subr.bf16.mxu0 0
        %1940 = vmatpush2.bf16.msra.mxu0 0
        %1941 = vmatprep.subr.bf16.mxu0 0
        %1942 = vmatpush2.bf16.msra.mxu0 0
        %1943 = vmatprep.subr.bf16.mxu0 0
        %1944 = vmatpush2.bf16.msra.mxu0 0
        %1945 = vmatprep.subr.bf16.mxu0 0
        %1946 = vmatpush2.bf16.msra.mxu0 0
        %1947 = vmatprep.subr.bf16.mxu0 0
        %1948 = vmatpush2.bf16.msra.mxu0 0
        %1949 = vmatprep.subr.bf16.mxu0 0
        %1950 = vmatpush2.bf16.msra.mxu0 0
        %1951 = vmatprep.subr.bf16.mxu0 0
        %1952 = vmatpush2.bf16.msra.mxu0 0
        %1953 = vmatprep.subr.bf16.mxu0 0
        %1954 = vmatpush2.bf16.msra.mxu0 0
        %1955 = vmatprep.mubr.bf16.mxu0 0
        %1956 = vmatmul.mubr.bf16.gmra.mxu0 %v1918
        %v1957 = vpop.f32.mrf.mxu0
        %v1958 = vadd.f32 0.0, %v1957
        %v1959 = vpop.f32.mrf.mxu0
        %v1960 = vpop.f32.mrf.mxu0
        %v1961 = vpop.f32.mrf.mxu0
        %1962 = vdwg.mxu0
        %v1964 = vsel %vm1633, %v1864, 0
        %v1967 = vsel %vm1873, %v1868, 0
        %1969 = vmatprep.subr.bf16.mxu0 0
        %1970 = vmatpush1.bf16.msra.mxu0 0
        %1971 = vmatprep.subr.bf16.mxu0 0
        %1972 = vmatpush1.bf16.msra.mxu0 0
        %1973 = vmatprep.subr.bf16.mxu0 0
        %1974 = vmatpush1.bf16.msra.mxu0 0
        %1975 = vmatprep.subr.bf16.mxu0 0
        %1976 = vmatpush1.bf16.msra.mxu0 0
        %1977 = vmatprep.subr.bf16.mxu0 0
        %1978 = vmatpush1.bf16.msra.mxu0 0
        %1979 = vmatprep.subr.bf16.mxu0 0
        %1980 = vmatpush1.bf16.msra.mxu0 0
        %1981 = vmatprep.subr.bf16.mxu0 0
        %1982 = vmatpush1.bf16.msra.mxu0 0
        %1983 = vmatprep.subr.bf16.mxu0 0
        %1984 = vmatpush1.bf16.msra.mxu0 %v1967
        %1985 = vmatprep.subr.bf16.mxu0 0
        %1986 = vmatpush2.bf16.msra.mxu0 0
        %1987 = vmatprep.subr.bf16.mxu0 0
        %1988 = vmatpush2.bf16.msra.mxu0 0
        %1989 = vmatprep.subr.bf16.mxu0 0
        %1990 = vmatpush2.bf16.msra.mxu0 0
        %1991 = vmatprep.subr.bf16.mxu0 0
        %1992 = vmatpush2.bf16.msra.mxu0 0
        %1993 = vmatprep.subr.bf16.mxu0 0
        %1994 = vmatpush2.bf16.msra.mxu0 0
        %1995 = vmatprep.subr.bf16.mxu0 0
        %1996 = vmatpush2.bf16.msra.mxu0 0
        %1997 = vmatprep.subr.bf16.mxu0 0
        %1998 = vmatpush2.bf16.msra.mxu0 0
        %1999 = vmatprep.subr.bf16.mxu0 0
        %2000 = vmatpush2.bf16.msra.mxu0 0
        %2001 = vmatprep.mubr.bf16.mxu0 0
        %2002 = vmatmul.mubr.bf16.gmra.mxu0 %v1964
        %v2003 = vpop.f32.mrf.mxu0
        %v2004 = vadd.f32 0.0, %v2003
        %v2005 = vpop.f32.mrf.mxu0
        %v2006 = vpop.f32.mrf.mxu0
        %v2007 = vpop.f32.mrf.mxu0
        %2008 = vdwg.mxu0
        %v2010 = vsel %vm1633, %v1865, 0
        %v2013 = vsel %vm1873, %v1869, 0
        %2015 = vmatprep.subr.bf16.mxu0 0
        %2016 = vmatpush1.bf16.msra.mxu0 0
        %2017 = vmatprep.subr.bf16.mxu0 0
        %2018 = vmatpush1.bf16.msra.mxu0 0
        %2019 = vmatprep.subr.bf16.mxu0 0
        %2020 = vmatpush1.bf16.msra.mxu0 0
        %2021 = vmatprep.subr.bf16.mxu0 0
        %2022 = vmatpush1.bf16.msra.mxu0 0
        %2023 = vmatprep.subr.bf16.mxu0 0
        %2024 = vmatpush1.bf16.msra.mxu0 0
        %2025 = vmatprep.subr.bf16.mxu0 0
        %2026 = vmatpush1.bf16.msra.mxu0 0
        %2027 = vmatprep.subr.bf16.mxu0 0
        %2028 = vmatpush1.bf16.msra.mxu0 0
        %2029 = vmatprep.subr.bf16.mxu0 0
        %2030 = vmatpush1.bf16.msra.mxu0 %v2013
        %2031 = vmatprep.subr.bf16.mxu0 0
        %2032 = vmatpush2.bf16.msra.mxu0 0
        %2033 = vmatprep.subr.bf16.mxu0 0
        %2034 = vmatpush2.bf16.msra.mxu0 0
        %2035 = vmatprep.subr.bf16.mxu0 0
        %2036 = vmatpush2.bf16.msra.mxu0 0
        %2037 = vmatprep.subr.bf16.mxu0 0
        %2038 = vmatpush2.bf16.msra.mxu0 0
        %2039 = vmatprep.subr.bf16.mxu0 0
        %2040 = vmatpush2.bf16.msra.mxu0 0
        %2041 = vmatprep.subr.bf16.mxu0 0
        %2042 = vmatpush2.bf16.msra.mxu0 0
        %2043 = vmatprep.subr.bf16.mxu0 0
        %2044 = vmatpush2.bf16.msra.mxu0 0
        %2045 = vmatprep.subr.bf16.mxu0 0
        %2046 = vmatpush2.bf16.msra.mxu0 0
        %2047 = vmatprep.mubr.bf16.mxu0 0
        %2048 = vmatmul.mubr.bf16.gmra.mxu0 %v2010
        %v2049 = vpop.f32.mrf.mxu0
        %v2050 = vadd.f32 0.0, %v2049
        %v2051 = vpop.f32.mrf.mxu0
        %v2052 = vpop.f32.mrf.mxu0
        %v2053 = vpop.f32.mrf.mxu0
        %2054 = vdwg.mxu0
        %v2055 = vpack.c.bf16 %v1912, %v1912
        %v2056 = vpack.c.bf16 %v1958, %v1958
        %v2057 = vpack.c.bf16 %v2004, %v2004
        %v2058 = vpack.c.bf16 %v2050, %v2050
        %v2059 = vld [vmem:[%s799] sm:$0xf]
        %v2060 = vld [vmem:[%s799 + $0x4] sm:$0xf]
        %v2061 = vld [vmem:[%s799 + $0x8] sm:$0xf]
        %v2062 = vld [vmem:[%s799 + $0xc] sm:$0xf]
        %v2064 = vsel %vm1633, %v2055, 0
        %v2067 = vsel %vm1873, %v2059, 0
        %2069 = vmatprep.subr.bf16.mxu0 0
        %2070 = vmatpush1.bf16.msra.mxu0 0
        %2071 = vmatprep.subr.bf16.mxu0 0
        %2072 = vmatpush1.bf16.msra.mxu0 0
        %2073 = vmatprep.subr.bf16.mxu0 0
        %2074 = vmatpush1.bf16.msra.mxu0 0
        %2075 = vmatprep.subr.bf16.mxu0 0
        %2076 = vmatpush1.bf16.msra.mxu0 0
        %2077 = vmatprep.subr.bf16.mxu0 0
        %2078 = vmatpush1.bf16.msra.mxu0 0
        %2079 = vmatprep.subr.bf16.mxu0 0
        %2080 = vmatpush1.bf16.msra.mxu0 0
        %2081 = vmatprep.subr.bf16.mxu0 0
        %2082 = vmatpush1.bf16.msra.mxu0 0
        %2083 = vmatprep.subr.bf16.mxu0 0
        %2084 = vmatpush1.bf16.msra.mxu0 %v2067
        %2085 = vmatprep.subr.bf16.mxu0 0
        %2086 = vmatpush2.bf16.msra.mxu0 0
        %2087 = vmatprep.subr.bf16.mxu0 0
        %2088 = vmatpush2.bf16.msra.mxu0 0
        %2089 = vmatprep.subr.bf16.mxu0 0
        %2090 = vmatpush2.bf16.msra.mxu0 0
        %2091 = vmatprep.subr.bf16.mxu0 0
        %2092 = vmatpush2.bf16.msra.mxu0 0
        %2093 = vmatprep.subr.bf16.mxu0 0
        %2094 = vmatpush2.bf16.msra.mxu0 0
        %2095 = vmatprep.subr.bf16.mxu0 0
        %2096 = vmatpush2.bf16.msra.mxu0 0
        %2097 = vmatprep.subr.bf16.mxu0 0
        %2098 = vmatpush2.bf16.msra.mxu0 0
        %2099 = vmatprep.subr.bf16.mxu0 0
        %2100 = vmatpush2.bf16.msra.mxu0 0
        %2101 = vmatprep.mubr.bf16.mxu0 0
        %2102 = vmatmul.mubr.bf16.gmra.mxu0 %v2064
        %v2103 = vpop.f32.mrf.mxu0
        %v2104 = vadd.f32 0.0, %v2103
        %v2105 = vpop.f32.mrf.mxu0
        %v2106 = vpop.f32.mrf.mxu0
        %v2107 = vpop.f32.mrf.mxu0
        %2108 = vdwg.mxu0
        %v2110 = vsel %vm1633, %v2056, 0
        %v2113 = vsel %vm1873, %v2060, 0
        %2115 = vmatprep.subr.bf16.mxu0 0
        %2116 = vmatpush1.bf16.msra.mxu0 0
        %2117 = vmatprep.subr.bf16.mxu0 0
        %2118 = vmatpush1.bf16.msra.mxu0 0
        %2119 = vmatprep.subr.bf16.mxu0 0
        %2120 = vmatpush1.bf16.msra.mxu0 0
        %2121 = vmatprep.subr.bf16.mxu0 0
        %2122 = vmatpush1.bf16.msra.mxu0 0
        %2123 = vmatprep.subr.bf16.mxu0 0
        %2124 = vmatpush1.bf16.msra.mxu0 0
        %2125 = vmatprep.subr.bf16.mxu0 0
        %2126 = vmatpush1.bf16.msra.mxu0 0
        %2127 = vmatprep.subr.bf16.mxu0 0
        %2128 = vmatpush1.bf16.msra.mxu0 0
        %2129 = vmatprep.subr.bf16.mxu0 0
        %2130 = vmatpush1.bf16.msra.mxu0 %v2113
        %2131 = vmatprep.subr.bf16.mxu0 0
        %2132 = vmatpush2.bf16.msra.mxu0 0
        %2133 = vmatprep.subr.bf16.mxu0 0
        %2134 = vmatpush2.bf16.msra.mxu0 0
        %2135 = vmatprep.subr.bf16.mxu0 0
        %2136 = vmatpush2.bf16.msra.mxu0 0
        %2137 = vmatprep.subr.bf16.mxu0 0
        %2138 = vmatpush2.bf16.msra.mxu0 0
        %2139 = vmatprep.subr.bf16.mxu0 0
        %2140 = vmatpush2.bf16.msra.mxu0 0
        %2141 = vmatprep.subr.bf16.mxu0 0
        %2142 = vmatpush2.bf16.msra.mxu0 0
        %2143 = vmatprep.subr.bf16.mxu0 0
        %2144 = vmatpush2.bf16.msra.mxu0 0
        %2145 = vmatprep.subr.bf16.mxu0 0
        %2146 = vmatpush2.bf16.msra.mxu0 0
        %2147 = vmatprep.mubr.bf16.mxu0 0
        %2148 = vmatmul.mubr.bf16.gmra.mxu0 %v2110
        %v2149 = vpop.f32.mrf.mxu0
        %v2150 = vadd.f32 0.0, %v2149
        %v2151 = vpop.f32.mrf.mxu0
        %v2152 = vpop.f32.mrf.mxu0
        %v2153 = vpop.f32.mrf.mxu0
        %2154 = vdwg.mxu0
        %v2156 = vsel %vm1633, %v2057, 0
        %v2159 = vsel %vm1873, %v2061, 0
        %2161 = vmatprep.subr.bf16.mxu0 0
        %2162 = vmatpush1.bf16.msra.mxu0 0
        %2163 = vmatprep.subr.bf16.mxu0 0
        %2164 = vmatpush1.bf16.msra.mxu0 0
        %2165 = vmatprep.subr.bf16.mxu0 0
        %2166 = vmatpush1.bf16.msra.mxu0 0
        %2167 = vmatprep.subr.bf16.mxu0 0
        %2168 = vmatpush1.bf16.msra.mxu0 0
        %2169 = vmatprep.subr.bf16.mxu0 0
        %2170 = vmatpush1.bf16.msra.mxu0 0
        %2171 = vmatprep.subr.bf16.mxu0 0
        %2172 = vmatpush1.bf16.msra.mxu0 0
        %2173 = vmatprep.subr.bf16.mxu0 0
        %2174 = vmatpush1.bf16.msra.mxu0 0
        %2175 = vmatprep.subr.bf16.mxu0 0
        %2176 = vmatpush1.bf16.msra.mxu0 %v2159
        %2177 = vmatprep.subr.bf16.mxu0 0
        %2178 = vmatpush2.bf16.msra.mxu0 0
        %2179 = vmatprep.subr.bf16.mxu0 0
        %2180 = vmatpush2.bf16.msra.mxu0 0
        %2181 = vmatprep.subr.bf16.mxu0 0
        %2182 = vmatpush2.bf16.msra.mxu0 0
        %2183 = vmatprep.subr.bf16.mxu0 0
        %2184 = vmatpush2.bf16.msra.mxu0 0
        %2185 = vmatprep.subr.bf16.mxu0 0
        %2186 = vmatpush2.bf16.msra.mxu0 0
        %2187 = vmatprep.subr.bf16.mxu0 0
        %2188 = vmatpush2.bf16.msra.mxu0 0
        %2189 = vmatprep.subr.bf16.mxu0 0
        %2190 = vmatpush2.bf16.msra.mxu0 0
        %2191 = vmatprep.subr.bf16.mxu0 0
        %2192 = vmatpush2.bf16.msra.mxu0 0
        %2193 = vmatprep.mubr.bf16.mxu0 0
        %2194 = vmatmul.mubr.bf16.gmra.mxu0 %v2156
        %v2195 = vpop.f32.mrf.mxu0
        %v2196 = vadd.f32 0.0, %v2195
        %v2197 = vpop.f32.mrf.mxu0
        %v2198 = vpop.f32.mrf.mxu0
        %v2199 = vpop.f32.mrf.mxu0
        %2200 = vdwg.mxu0
        %v2202 = vsel %vm1633, %v2058, 0
        %v2205 = vsel %vm1873, %v2062, 0
        %2207 = vmatprep.subr.bf16.mxu0 0
        %2208 = vmatpush1.bf16.msra.mxu0 0
        %2209 = vmatprep.subr.bf16.mxu0 0
        %2210 = vmatpush1.bf16.msra.mxu0 0
        %2211 = vmatprep.subr.bf16.mxu0 0
        %2212 = vmatpush1.bf16.msra.mxu0 0
        %2213 = vmatprep.subr.bf16.mxu0 0
        %2214 = vmatpush1.bf16.msra.mxu0 0
        %2215 = vmatprep.subr.bf16.mxu0 0
        %2216 = vmatpush1.bf16.msra.mxu0 0
        %2217 = vmatprep.subr.bf16.mxu0 0
        %2218 = vmatpush1.bf16.msra.mxu0 0
        %2219 = vmatprep.subr.bf16.mxu0 0
        %2220 = vmatpush1.bf16.msra.mxu0 0
        %2221 = vmatprep.subr.bf16.mxu0 0
        %2222 = vmatpush1.bf16.msra.mxu0 %v2205
        %2223 = vmatprep.subr.bf16.mxu0 0
        %2224 = vmatpush2.bf16.msra.mxu0 0
        %2225 = vmatprep.subr.bf16.mxu0 0
        %2226 = vmatpush2.bf16.msra.mxu0 0
        %2227 = vmatprep.subr.bf16.mxu0 0
        %2228 = vmatpush2.bf16.msra.mxu0 0
        %2229 = vmatprep.subr.bf16.mxu0 0
        %2230 = vmatpush2.bf16.msra.mxu0 0
        %2231 = vmatprep.subr.bf16.mxu0 0
        %2232 = vmatpush2.bf16.msra.mxu0 0
        %2233 = vmatprep.subr.bf16.mxu0 0
        %2234 = vmatpush2.bf16.msra.mxu0 0
        %2235 = vmatprep.subr.bf16.mxu0 0
        %2236 = vmatpush2.bf16.msra.mxu0 0
        %2237 = vmatprep.subr.bf16.mxu0 0
        %2238 = vmatpush2.bf16.msra.mxu0 0
        %2239 = vmatprep.mubr.bf16.mxu0 0
        %2240 = vmatmul.mubr.bf16.gmra.mxu0 %v2202
        %v2241 = vpop.f32.mrf.mxu0
        %v2242 = vadd.f32 0.0, %v2241
        %v2243 = vpop.f32.mrf.mxu0
        %v2244 = vpop.f32.mrf.mxu0
        %v2245 = vpop.f32.mrf.mxu0
        %2246 = vdwg.mxu0
        %v2247 = vadd.f32 %v2104, %v2150
        %v2248 = vadd.f32 %v2247, %v2196
        %v2249 = vadd.f32 %v2248, %v2242
        %v2250 = vld [vmem:[%s802] sm:$0x1]
        %v2252 = vlaneseq
        %v2253 = vshrl.u32 %v2252, 7
        %v2254 = vsub.s32 0, %v2253
        %v2255 = vrot.slane %v2250, %v2254
        %v2257 = vadd.f32 %v2249, %v2255
        %v2258 = vadd.f32 %v833, %v2257
        %v2259 = vsel %vm834, %v2258, 0.0
        %2260 = vadd.xlane.f32.xlu0 %v2259
        %v2261 = vpop.xlane.xlu0 %2260
        %v2262 = vmul.f32 %v2261, %v838
        %v2263 = vsub.f32 %v2258, %v2262
        %v2264 = vmul.f32 %v2263, %v2263
        %v2265 = vsel %vm834, %v2264, 0.0
        %2266 = vadd.xlane.f32.xlu0 %v2265
        %v2267 = vpop.xlane.xlu0 %2266
        %v2268 = vmul.f32 %v2267, %v838
        %v2269 = vadd.f32 %v2268, 1e-05
        %v2270 = vrsqrt.pop %v2269
        %v2271 = vmul.f32 %v2263, %v2270
        %v2272 = vld [vmem:[%s805] sm:$0x1]
        %v2274 = vlaneseq
        %v2275 = vshrl.u32 %v2274, 7
        %v2276 = vsub.s32 0, %v2275
        %v2277 = vrot.slane %v2272, %v2276
        %v2279 = vmul.f32 %v2271, %v2277
        %v2280 = vld [vmem:[%s808] sm:$0x1]
        %v2282 = vlaneseq
        %v2283 = vshrl.u32 %v2282, 7
        %v2284 = vsub.s32 0, %v2283
        %v2285 = vrot.slane %v2280, %v2284
        %v2287 = vadd.f32 %v2279, %v2285
        %v2288 = vpack.c.bf16 %v2287, %v2287
        %v2289 = vld [vmem:[%s813] sm:$0xf]
        %v2290 = vld [vmem:[%s813 + $0x4] sm:$0xf]
        %v2291 = vld [vmem:[%s813 + $0x8] sm:$0xf]
        %v2292 = vld [vmem:[%s813 + $0xc] sm:$0xf]
        %v2293 = vld [vmem:[%s816] sm:$0x1]
        %v2295 = vlaneseq
        %v2296 = vshrl.u32 %v2295, 7
        %v2297 = vsub.s32 0, %v2296
        %v2298 = vrot.slane %v2293, %v2297
        %v2304 = vunpack.c.l.b16 %v2289
        %v2305 = vunpack.c.l.b16 %v2290
        %v2306 = vunpack.c.l.b16 %v2291
        %v2307 = vunpack.c.l.b16 %v2292
        %v2308 = vpack.c.b16 %v2305, %v2304
        %v2309 = vpack.c.b16 %v2307, %v2306
        %v2313 = vsel %vm834, %v2288, 0
        %2315 = vmatprep.subr.bf16.mxu0 0
        %2316 = vmatpush1.bf16.msra.mxu0 0
        %2317 = vmatprep.subr.bf16.mxu0 0
        %2318 = vmatpush1.bf16.msra.mxu0 0
        %2319 = vmatprep.subr.bf16.mxu0 0
        %2320 = vmatpush1.bf16.msra.mxu0 0
        %2321 = vmatprep.subr.bf16.mxu0 0
        %2322 = vmatpush1.bf16.msra.mxu0 0
        %2323 = vmatprep.subr.bf16.mxu0 0
        %2324 = vmatpush1.bf16.msra.mxu0 0
        %2325 = vmatprep.subr.bf16.mxu0 0
        %2326 = vmatpush1.bf16.msra.mxu0 0
        %2327 = vmatprep.subr.bf16.mxu0 0
        %2328 = vmatpush1.bf16.msra.mxu0 %v2309
        %2329 = vmatprep.subr.bf16.mxu0 0
        %2330 = vmatpush1.bf16.msra.mxu0 %v2308
        %2331 = vmatprep.subr.bf16.mxu0 0
        %2332 = vmatpush2.bf16.msra.mxu0 0
        %2333 = vmatprep.subr.bf16.mxu0 0
        %2334 = vmatpush2.bf16.msra.mxu0 0
        %2335 = vmatprep.subr.bf16.mxu0 0
        %2336 = vmatpush2.bf16.msra.mxu0 0
        %2337 = vmatprep.subr.bf16.mxu0 0
        %2338 = vmatpush2.bf16.msra.mxu0 0
        %2339 = vmatprep.subr.bf16.mxu0 0
        %2340 = vmatpush2.bf16.msra.mxu0 0
        %2341 = vmatprep.subr.bf16.mxu0 0
        %2342 = vmatpush2.bf16.msra.mxu0 0
        %2343 = vmatprep.subr.bf16.mxu0 0
        %2344 = vmatpush2.bf16.msra.mxu0 0
        %2345 = vmatprep.subr.bf16.mxu0 0
        %2346 = vmatpush2.bf16.msra.mxu0 0
        %2347 = vmatprep.mubr.bf16.mxu0 0
        %2348 = vmatmul.mubr.bf16.gmra.mxu0 %v2313
        %v2349 = vpop.f32.mrf.mxu0
        %v2350 = vadd.f32 %v2298, %v2349
        %v2351 = vpop.f32.mrf.mxu0
        %v2352 = vpop.f32.mrf.mxu0
        %v2353 = vpop.f32.mrf.mxu0
        %2354 = vdwg.mxu0
        %v2355 = vmul.f32 %v2350, 1.702
        %v2356 = vxor.u32 %v2355, 2147483648
        %v2357 = vmul.f32 %v2356, 1.442695
        %v2358 = vpow.pop %v2357
        %v2359 = vadd.f32 %v2358, 1.0
        %v2360 = vrcp.pop %v2359
        %v2361 = vmul.f32 1.0, %v2360
        %v2362 = vmul.f32 %v2350, %v2361
        %v2363 = vpack.c.bf16 %v2362, %v2362
        %v2364 = vld [vmem:[%s821] sm:$0xf]
        %v2365 = vld [vmem:[%s821 + $0x4] sm:$0xf]
        %v2366 = vld [vmem:[%s821 + $0x8] sm:$0xf]
        %v2367 = vld [vmem:[%s821 + $0xc] sm:$0xf]
        %v2368 = vld [vmem:[%s821 + $0x10] sm:$0xf]
        %v2369 = vld [vmem:[%s821 + $0x14] sm:$0xf]
        %v2370 = vld [vmem:[%s821 + $0x18] sm:$0xf]
        %v2371 = vld [vmem:[%s821 + $0x1c] sm:$0xf]
        %v2372 = vld [vmem:[%s821 + $0x20] sm:$0xf]
        %v2373 = vld [vmem:[%s821 + $0x24] sm:$0xf]
        %v2374 = vld [vmem:[%s821 + $0x28] sm:$0xf]
        %v2375 = vld [vmem:[%s821 + $0x2c] sm:$0xf]
        %v2376 = vld [vmem:[%s821 + $0x30] sm:$0xf]
        %v2377 = vld [vmem:[%s821 + $0x34] sm:$0xf]
        %v2378 = vld [vmem:[%s821 + $0x38] sm:$0xf]
        %v2379 = vld [vmem:[%s821 + $0x3c] sm:$0xf]
        %v2380 = vld [vmem:[%s824] sm:$0x1]
        %v2382 = vlaneseq
        %v2383 = vshrl.u32 %v2382, 7
        %v2384 = vsub.s32 0, %v2383
        %v2385 = vrot.slane %v2380, %v2384
        %v2403 = vunpack.c.l.b16 %v2364
        %v2404 = vunpack.c.l.b16 %v2365
        %v2405 = vunpack.c.l.b16 %v2366
        %v2406 = vunpack.c.l.b16 %v2367
        %v2407 = vunpack.c.l.b16 %v2368
        %v2408 = vunpack.c.l.b16 %v2369
        %v2409 = vunpack.c.l.b16 %v2370
        %v2410 = vunpack.c.l.b16 %v2371
        %v2411 = vunpack.c.l.b16 %v2372
        %v2412 = vunpack.c.l.b16 %v2373
        %v2413 = vunpack.c.l.b16 %v2374
        %v2414 = vunpack.c.l.b16 %v2375
        %v2415 = vunpack.c.l.b16 %v2376
        %v2416 = vunpack.c.l.b16 %v2377
        %v2417 = vunpack.c.l.b16 %v2378
        %v2418 = vunpack.c.l.b16 %v2379
        %v2419 = vpack.c.b16 %v2404, %v2403
        %v2420 = vpack.c.b16 %v2406, %v2405
        %v2421 = vpack.c.b16 %v2408, %v2407
        %v2422 = vpack.c.b16 %v2410, %v2409
        %v2423 = vpack.c.b16 %v2412, %v2411
        %v2424 = vpack.c.b16 %v2414, %v2413
        %v2425 = vpack.c.b16 %v2416, %v2415
        %v2426 = vpack.c.b16 %v2418, %v2417
        %2435 = vmatprep.subr.bf16.mxu0 0
        %2436 = vmatpush1.bf16.msra.mxu0 %v2426
        %2437 = vmatprep.subr.bf16.mxu0 0
        %2438 = vmatpush1.bf16.msra.mxu0 %v2425
        %2439 = vmatprep.subr.bf16.mxu0 0
        %2440 = vmatpush1.bf16.msra.mxu0 %v2424
        %2441 = vmatprep.subr.bf16.mxu0 0
        %2442 = vmatpush1.bf16.msra.mxu0 %v2423
        %2443 = vmatprep.subr.bf16.mxu0 0
        %2444 = vmatpush1.bf16.msra.mxu0 %v2422
        %2445 = vmatprep.subr.bf16.mxu0 0
        %2446 = vmatpush1.bf16.msra.mxu0 %v2421
        %2447 = vmatprep.subr.bf16.mxu0 0
        %2448 = vmatpush1.bf16.msra.mxu0 %v2420
        %2449 = vmatprep.subr.bf16.mxu0 0
        %2450 = vmatpush1.bf16.msra.mxu0 %v2419
        %2451 = vmatprep.subr.bf16.mxu0 0
        %2452 = vmatpush2.bf16.msra.mxu0 0
        %2453 = vmatprep.subr.bf16.mxu0 0
        %2454 = vmatpush2.bf16.msra.mxu0 0
        %2455 = vmatprep.subr.bf16.mxu0 0
        %2456 = vmatpush2.bf16.msra.mxu0 0
        %2457 = vmatprep.subr.bf16.mxu0 0
        %2458 = vmatpush2.bf16.msra.mxu0 0
        %2459 = vmatprep.subr.bf16.mxu0 0
        %2460 = vmatpush2.bf16.msra.mxu0 0
        %2461 = vmatprep.subr.bf16.mxu0 0
        %2462 = vmatpush2.bf16.msra.mxu0 0
        %2463 = vmatprep.subr.bf16.mxu0 0
        %2464 = vmatpush2.bf16.msra.mxu0 0
        %2465 = vmatprep.subr.bf16.mxu0 0
        %2466 = vmatpush2.bf16.msra.mxu0 0
        %2467 = vmatprep.mubr.bf16.mxu0 0
        %2468 = vmatmul.mubr.bf16.gmra.mxu0 %v2363
        %v2469 = vpop.f32.mrf.mxu0
        %v2470 = vadd.f32 %v2385, %v2469
        %v2471 = vpop.f32.mrf.mxu0
        %v2472 = vpop.f32.mrf.mxu0
        %v2473 = vpop.f32.mrf.mxu0
        %2474 = vdwg.mxu0
        %v2475 = vadd.f32 %v2258, %v2470
        %2476 = vst.msk [vmem:[#allocation2] sm:$0xff] %vm834, %v2475
        %p2477 = scmp.eq.s32.totalorder %s36, 1
        // Predicated region
        $region93: #{tpu_custom_call.1} parent=87 // pred_check
          %p2478 = pneg %p2477
        $region94: #{tpu_custom_call.1} parent=87 // pred_check_branch
          %2480 = sbr.rel (%p2478) target = $region96
        $region95: #{tpu_custom_call.1} parent=87 // pred_region
          %2481 = vst.msk [vmem:[%s757] sm:$0xff] %vm834, %v2475
        $region96: #{tpu_custom_call.1} parent=87 // pred_fallthru
          _
        %s2482 = sand.u32 %s493, 1
        %s2483 = scalar_lea.sflag [#allocation4], %s2482
        %s2484 = sand.u32 %s493, 1
        %s2485 = smul.addr %s2484, 8
        %s2486 = scalar_lea.vmem [#allocation3], %s2485
        // Predicated region
        $region97: #{tpu_custom_call.1} parent=87 // pred_check
          %p2487 = pneg %p503
        $region98: #{tpu_custom_call.1} parent=87 // pred_check_branch
          %2489 = sbr.rel (%p2487) target = $region100
        $region99: #{tpu_custom_call.1} parent=87 // pred_region
          %s2491 = ssub.s32 128, 128
          %2492 = vsyncadd %s2483, %s2491
          %s2493 = smul.addr %s35, 128
          %s2494 = scalar_lea.hbm %s17, %s2493
          %s2496 = sshll.u32 %s2486, 4
          %s2497 = int_to_ptr.vmem [resolvable:$true] %s2496
          %2499 = dma.vmem_to_hbm [thread:$0]  %s2497, 128, %s2494, %s2483
        $region100: #{tpu_custom_call.1} parent=87 // pred_fallthru
          _
      $region88: #{tpu_custom_call.1} parent=5 // pred_fallthru
        _
      %p2500 = scmp.le.s32.totalorder 2, %s26
      // Predicated region
      $region101: #{tpu_custom_call.1} parent=5 // pred_check
        %p2501 = pneg %p2500
      $region102: #{tpu_custom_call.1} parent=5 // pred_check_branch
        %2503 = sbr.rel (%p2501) target = $region104
      $region103: #{tpu_custom_call.1} parent=5 // pred_region
        %s2504 = ssub.s32 %s26, 2
        // Predicated region
        $region105: #{tpu_custom_call.1} parent=103 // pred_check
          %p2505 = pneg %p509
        $region106: #{tpu_custom_call.1} parent=103 // pred_check_branch
          %2507 = sbr.rel (%p2505) target = $region108
        $region107: #{tpu_custom_call.1} parent=103 // pred_region
          %s2508 = sand.u32 %s494, 1
          %s2509 = scalar_lea.sflag [#allocation4], %s2508
          %s2510 = sand.u32 %s494, 1
          %s2511 = smul.addr %s2510, 8
          %s2512 = scalar_lea.vmem [#allocation3], %s2511
          %2513 = dma.done %s2509, 128
        $region108: #{tpu_custom_call.1} parent=103 // pred_fallthru
          _
      $region104: #{tpu_custom_call.1} parent=5 // pred_fallthru
        _
    $region6: #{tpu_custom_call.1} parent=1 // loop_footer
      %s30 = sadd.s32 1, %s26
    $region7: #{tpu_custom_call.1} parent=1 // loop_footer_branch
      %25 = sbr.rel target = $region3
    $region8: #{tpu_custom_call.1} parent=1 // loop_exit
      _
    %2514 = vsyncpa [#allocation4], 1
    %s2515 = scalar_lea.sflag [#allocation4], 1
    %2516 = vsyncpa %s2515, 1

</llo_original>
